<compile_context>
chip_gen: v6e
topology: v6e:2x2x1
jax: 0.10.0
libtpu: 0.0.40
codegen_flags: <defaults>
</compile_context>

<pallas_src>
import functools

import numpy as np
import jax
import jax.numpy as jnp
from jax import lax
from jax.experimental import pallas as pl
from jax.experimental.pallas import tpu as pltpu


# ----------------------------------------------------------------------------
# Fused kernel: one grid step = (one caption) x (one block of images).
# ----------------------------------------------------------------------------
def _textual_graph_kernel(
    lens_ref,                                   # (n_caption,) i32 scalar prefetch (SMEM)
    cap_ref,                                    # (1, W, D)    bf16 caption (padded)
    adj_ref,                                    # (1, W, W)    f32  dependency adjacency
    img_ref,                                    # (B, R, D)    bf16 image block
    wg_ref, bg_ref, wfused_ref, bfused_ref, w2_ref, b2_ref,     # f32 params (replicated)
    sim_ref,                                    # (1, 1, B, 1, 1) f32 per-pair similarity
    mu_ref, sigma_ref,                          # (1, B, W, hid)  f32 mixture outputs
    acc_mu, acc_m2, m_sc, l_sc,                 # VMEM scratch (online softmax over captions)
    *, lam, hid, out_dim, num_block):
    c = pl.program_id(1)
    n_cap = pl.num_programs(1)
    n_word = lens_ref[c]
    n_word_f = n_word.astype(jnp.float32)

    adj = adj_ref[0]                            # (W, W) f32 (zero outside valid block)
    K = img_ref[...]                            # (B, R, D) bf16
    B, R, D = K.shape
    W = adj.shape[0]
    n_blk = D // num_block
    BW = B * W

    row_ids = lax.broadcasted_iota(jnp.int32, (W, 1), 0)
    col_ids = lax.broadcasted_iota(jnp.int32, (1, W), 1)
    rmask = (row_ids < n_word).astype(jnp.float32)        # (W, 1) valid words (rows)
    col_valid = col_ids < n_word                          # (1, W) valid words (cols)

    Qf = cap_ref[0].astype(jnp.float32) * rmask           # (W, D) f32, padded words zeroed
    Qb = Qf.astype(jnp.bfloat16)                          # bf16 copy for the MXU

    # ---- intra_relations(cap, cap, lambda): softmax over valid word columns ----
    intra = lax.dot_general(Qb, Qb, (((1,), (1,)), ((), ())),
                            preferred_element_type=jnp.float32) * lam      # (W, W)
    intra = jnp.where(col_valid, intra, -1e30)
    e1 = jnp.exp(intra - jnp.max(intra, axis=1, keepdims=True))
    words_sim = e1 * pl.reciprocal(jnp.sum(e1, axis=1, keepdims=True), approx=True)

    # ---- structure-level neighbor weights (caption-only, shared by every image) ----
    wn = adj * words_sim
    wn = wn / (jnp.sqrt(jnp.sum(wn * wn, axis=1, keepdims=True)) + 1e-8)    # l2norm over j
    agg = jnp.sum(wn * adj, axis=1, keepdims=True)                          # (W, 1)

    # ---- inter_relations(images, cap): flash-style batched einsums, no transposes ----
    Q_bc = jnp.broadcast_to(Qb[None], (B, W, D))
    attn = jnp.einsum('bwd,brd->bwr', Q_bc, K,
                      preferred_element_type=jnp.float32)                   # (B, W, R)
    attn = jnp.where(attn >= 0.0, attn, 0.1 * attn)                         # LeakyReLU(0.1)
    attn = attn / (jnp.sqrt(jnp.sum(attn * attn, axis=1, keepdims=True)) + 1e-8)  # l2norm over words
    logits = attn * lam
    e2 = jnp.exp(logits - jnp.max(logits, axis=2, keepdims=True))           # softmax over regions
    attn_sm = e2 * pl.reciprocal(jnp.sum(e2, axis=2, keepdims=True), approx=True)
    wctx = jnp.einsum('bwr,brd->bwd', attn_sm.astype(jnp.bfloat16), K,
                      preferred_element_type=jnp.float32)                   # (B, W, D)

    # ---- node-level matching: block-wise cosine via an in-kernel selector matmul ----
    d_ids = lax.broadcasted_iota(jnp.int32, (D, num_block), 0)
    k_ids = lax.broadcasted_iota(jnp.int32, (D, num_block), 1)
    blk_sel = ((d_ids >= k_ids * n_blk) &
               (d_ids < (k_ids + 1) * n_blk)).astype(jnp.float32)           # (D, num_block)

    q_rows = jnp.broadcast_to(Qf[None], (B, W, D)).reshape(BW, D)           # (B*W, D) f32
    c_rows = wctx.reshape(BW, D)
    w12 = jnp.dot(q_rows * c_rows, blk_sel, preferred_element_type=jnp.float32)
    qss = jnp.dot(q_rows * q_rows, blk_sel, preferred_element_type=jnp.float32)
    css = jnp.dot(c_rows * c_rows, blk_sel, preferred_element_type=jnp.float32)
    tnode = w12 / jnp.maximum(jnp.sqrt(qss * css), 1e-8)                    # (B*W, num_block)

    # ---- graph convolution + Gaussian head + weight-norm MLP on B*W stacked rows ----
    # TODO(synk): TextQueryGraphConvolution's body is not in the reference source; with
    # neighbor_nodes[b,i,j,:] = adj[i,j]*tnode[b,i,:] we aggregate over j as
    # msg[i,:] = tnode[i,:] * sum_j adj[i,j]*wn[i,j], followed by Linear + ReLU.
    agg_rows = jnp.broadcast_to(agg[None], (B, W, 1)).reshape(BW, 1)
    msg = tnode * agg_rows
    hidden = jnp.maximum(
        jnp.dot(msg, wg_ref[...], preferred_element_type=jnp.float32) + bg_ref[...], 0.0)
    proj = jnp.dot(hidden, wfused_ref[...],
                   preferred_element_type=jnp.float32) + bfused_ref[...]    # (B*W, 3*hid)
    mu_c = proj[:, 0:hid]
    sigma_c = jnp.exp(0.5 * proj[:, hid:2 * hid])   # RBF diag K(x,x)==1 => sigma unchanged
    h1 = jnp.tanh(proj[:, 2 * hid:3 * hid])
    s_mat = jnp.dot(h1, w2_ref[...], preferred_element_type=jnp.float32) + b2_ref[...]

    # per-image phrase similarity: mean over the n_word valid words x out_dim
    rmask3 = rmask[None]                                                    # (1, W, 1)
    s3 = s_mat.reshape(B, W, out_dim) * rmask3
    s_img = jnp.sum(jnp.sum(s3, axis=2, keepdims=True), axis=1, keepdims=True)  # (B, 1, 1)
    s_img = s_img / (n_word_f * float(out_dim))
    sim_ref[0, 0] = s_img                                                   # one scalar per pair

    # ---- fused Gaussian-mixture over captions: online softmax + moment matching ----
    mu3 = mu_c.reshape(B, W, hid) * rmask3                                  # padded rows -> 0
    sg3 = sigma_c.reshape(B, W, hid) * rmask3

    @pl.when(c == 0)
    def _():
        m_sc[...] = jnp.full(m_sc.shape, -1e30, jnp.float32)
        l_sc[...] = jnp.zeros_like(l_sc)
        acc_mu[...] = jnp.zeros_like(acc_mu)
        acc_m2[...] = jnp.zeros_like(acc_m2)

    m_old = m_sc[...]                                                       # (B, 1, 1)
    m_new = jnp.maximum(m_old, s_img)
    a = jnp.exp(m_old - m_new)
    e = jnp.exp(s_img - m_new)
    l_sc[...] = a * l_sc[...] + e
    acc_mu[...] = a * acc_mu[...] + e * mu3
    acc_m2[...] = a * acc_m2[...] + e * (sg3 * sg3 + mu3 * mu3)
    m_sc[...] = m_new

    @pl.when(c == n_cap - 1)
    def _():
        inv_l = 1.0 / l_sc[...]                                             # (B, 1, 1)
        mu_w = acc_mu[...] * inv_l
        var_w = acc_m2[...] * inv_l - mu_w * mu_w
        mu_ref[0] = mu_w
        sigma_ref[0] = jnp.sqrt(jnp.maximum(var_w, 1e-8))


def textual_graph_pallas(images, captions, adj, cap_lens, params, lam, num_block,
                         img_block=32):
    n_image, R, D = images.shape
    n_caption, W, _ = captions.shape
    hid = params["wg"].shape[1]
    out_dim = params["w2"].shape[1]
    assert D % num_block == 0

    b_img = min(img_block, n_image)
    n_blocks = pl.cdiv(n_image, b_img)
    n_image_pad = n_blocks * b_img
    if n_image_pad != n_image:
        pad = jnp.zeros((n_image_pad - n_image, R, D), images.dtype)
        images = jnp.concatenate([images, pad], axis=0)

    images_bf = images.astype(jnp.bfloat16)      # streamed operands in bf16 (MXU native)
    captions_bf = captions.astype(jnp.bfloat16)

    # fc_mu | fc_logvar | out_1 fused into one (hid, 3*hid) weight -> single MXU pass
    wfused = jnp.concatenate([params["wmu"], params["wlv"], params["w1"]], axis=1)
    bfused = jnp.concatenate([params["bmu"], params["blv"], params["b1"]], axis=1)

    kern = functools.partial(_textual_graph_kernel, lam=float(lam), hid=hid,
                             out_dim=out_dim, num_block=num_block)

    def rep(arr):                                # replicated (whole) parameter block
        nd = arr.ndim
        return pl.BlockSpec(arr.shape, lambda b, c, lens, _nd=nd: (0,) * _nd)

    grid_spec = pltpu.PrefetchScalarGridSpec(
        num_scalar_prefetch=1,
        # Image blocks outer ("parallel": shards across v7x's 2 TensorCores); captions
        # inner ("arbitrary"): the image block stays resident in VMEM over the whole
        # caption sweep (DMA elision) and the mixture accumulators live in scratch.
        grid=(n_blocks, n_caption),
        in_specs=[
            pl.BlockSpec((1, W, D), lambda b, c, lens: (c, 0, 0)),        # caption
            pl.BlockSpec((1, W, W), lambda b, c, lens: (c, 0, 0)),        # adjacency
            pl.BlockSpec((b_img, R, D), lambda b, c, lens: (b, 0, 0)),    # image block
            rep(params["wg"]), rep(params["bg"]), rep(wfused), rep(bfused),
            rep(params["w2"]), rep(params["b2"]),
        ],
        out_specs=(
            pl.BlockSpec((1, 1, b_img, 1, 1), lambda b, c, lens: (c, b, 0, 0, 0)),
            pl.BlockSpec((1, b_img, W, hid), lambda b, c, lens: (b, 0, 0, 0)),
            pl.BlockSpec((1, b_img, W, hid), lambda b, c, lens: (b, 0, 0, 0)),
        ),
        scratch_shapes=[
            pltpu.VMEM((b_img, W, hid), jnp.float32),    # weighted-mu accumulator
            pltpu.VMEM((b_img, W, hid), jnp.float32),    # weighted second-moment accumulator
            pltpu.VMEM((b_img, 1, 1), jnp.float32),      # running max (online softmax)
            pltpu.VMEM((b_img, 1, 1), jnp.float32),      # running denominator
        ],
    )
    out_shape = (
        jax.ShapeDtypeStruct((n_caption, n_blocks, b_img, 1, 1), jnp.float32),  # sims
        jax.ShapeDtypeStruct((n_blocks, b_img, W, hid), jnp.float32),           # mu_word
        jax.ShapeDtypeStruct((n_blocks, b_img, W, hid), jnp.float32),           # sigma_word
    )
    sims, mu_word, sigma_word = pl.pallas_call(
        kern, grid_spec=grid_spec, out_shape=out_shape,
        compiler_params=pltpu.CompilerParams(
            dimension_semantics=("parallel", "arbitrary"),
            vmem_limit_bytes=32 * 1024 * 1024),
    )(cap_lens, captions_bf, adj, images_bf,
      params["wg"], params["bg"], wfused, bfused, params["w2"], params["b2"])

    similarities = sims.reshape(n_caption, n_image_pad)[:, :n_image].T   # (n_image, n_caption)
    mu_word = mu_word.reshape(n_image_pad, W, hid)[:n_image]
    sigma_word = sigma_word.reshape(n_image_pad, W, hid)[:n_image]
    return similarities, mu_word, sigma_word


# ----------------------------------------------------------------------------
# Host-side glue: adjacency construction, parameter init, full forward.
# ----------------------------------------------------------------------------
def build_sparse_graph(dep, lens, max_words):
    # TextualGraph.build_sparse_graph, zero-padded to max_words (self-loops only on
    # valid words) so captions of different length share one kernel.  The mixture /
    # graph masking relies on padded adjacency rows staying exactly zero.
    adj = np.zeros((max_words, max_words), dtype=np.float32)
    for i, pair in enumerate(dep):
        if i == 0 or pair[0] >= lens or pair[1] >= lens:
            continue
        adj[pair[0], pair[1]] = 1.0
        adj[pair[1], pair[0]] = 1.0
    adj[:lens, :lens] += np.eye(lens, dtype=np.float32)
    return adj


def init_params(key, feat_dim, hid_dim, out_dim):
    ks = jax.random.split(key, 10)

    def lin(k, din, dout, scale=0.1):
        return scale * jax.random.normal(k, (din, dout), jnp.float32)

    params = {
        "wg": lin(ks[0], feat_dim, hid_dim),                                 # graph conv
        "bg": 0.01 * jax.random.normal(ks[1], (1, hid_dim), jnp.float32),
        "wmu": lin(ks[2], hid_dim, hid_dim),                                 # fc_mu
        "bmu": 0.01 * jax.random.normal(ks[3], (1, hid_dim), jnp.float32),
        "wlv": lin(ks[4], hid_dim, hid_dim),                                 # fc_logvar
        "blv": 0.01 * jax.random.normal(ks[5], (1, hid_dim), jnp.float32),
    }
    # weight_norm(Linear): effective W = g * v / ||v|| (per output row), applied as glue.
    v1 = 0.1 * jax.random.normal(ks[6], (hid_dim, hid_dim), jnp.float32)
    g1 = jnp.ones((hid_dim,), jnp.float32)
    w1 = g1[:, None] * v1 / jnp.linalg.norm(v1, axis=1, keepdims=True)
    v2 = 0.1 * jax.random.normal(ks[7], (out_dim, hid_dim), jnp.float32)
    g2 = jnp.ones((out_dim,), jnp.float32)
    w2 = g2[:, None] * v2 / jnp.linalg.norm(v2, axis=1, keepdims=True)
    params["w1"] = w1.T                                                      # (in, out)
    params["b1"] = 0.01 * jax.random.normal(ks[8], (1, hid_dim), jnp.float32)
    params["w2"] = w2.T
    params["b2"] = 0.01 * jax.random.normal(ks[9], (1, out_dim), jnp.float32)
    return params


class Opt:
    embed_size = 32
    num_block = 4          # -> n_block (chunk size) = 8, node-matching vector size = 4
    lambda_softmax = 4.0


def textual_graph_forward(images, captions, depends, cap_lens, params, opt):
    n_caption, max_words, _ = captions.shape
    adj_np = np.zeros((n_caption, max_words, max_words), np.float32)
    for i in range(n_caption):
        adj_np[i] = build_sparse_graph(depends[i], int(cap_lens[i]), max_words)
    adj = jnp.asarray(adj_np)
    lens = jnp.asarray(np.asarray(cap_lens, dtype=np.int32))
    return textual_graph_pallas(images, captions, adj, lens, params,
                                opt.lambda_softmax, opt.num_block)


if __name__ == "__main__":
    opt = Opt()
    n_image, n_regions = 2, 16
    n_caption, max_words = 3, 8
    feat_dim = opt.num_block            # node-matching vector size feeding the graph conv
    hid_dim, out_dim = 32, 16

    key = jax.random.PRNGKey(0)
    k_img, k_cap, k_par = jax.random.split(key, 3)
    images = jax.random.normal(k_img, (n_image, n_regions, opt.embed_size), jnp.float32)
    captions = jax.random.normal(k_cap, (n_caption, max_words, opt.embed_size), jnp.float32)
    cap_lens = [max_words] * n_caption
    depends = [
        [(0, 0), (0, 1), (1, 2), (2, 3), (3, 4), (4, 5), (5, 6), (6, 7)],
        [(0, 0), (1, 3), (2, 5), (0, 7), (4, 6), (1, 2)],
        [(0, 0), (2, 2), (3, 6), (5, 1), (7, 0), (9, 4)],
    ]
    params = init_params(k_par, feat_dim, hid_dim, out_dim)

    similarities, mu_word, sigma_word = textual_graph_forward(
        images, captions, depends, cap_lens, params, opt)
    jax.block_until_ready((similarities, mu_word, sigma_word))

    assert similarities.shape == (n_image, n_caption)
    assert mu_word.shape == (n_image, max_words, hid_dim)
    assert sigma_word.shape == (n_image, max_words, hid_dim)
    assert bool(jnp.all(jnp.isfinite(similarities)))
    assert bool(jnp.all(jnp.isfinite(mu_word)))
    assert bool(jnp.all(sigma_word > 0.0))
    print("KERNEL_OK")
</pallas_src>

<mosaic_0001>
module attributes {stable_mosaic.version = 11 : i64} {
  func.func @_textual_graph_kernel(%arg0: i32, %arg1: i32, %arg2: memref<3xi32, #tpu.memory_space<smem>>, %arg3: memref<1x8x32xbf16, #tpu.memory_space<vmem>>, %arg4: memref<1x8x8xf32, #tpu.memory_space<vmem>>, %arg5: memref<2x16x32xbf16, #tpu.memory_space<vmem>>, %arg6: memref<4x32xf32, #tpu.memory_space<vmem>>, %arg7: memref<1x32xf32, #tpu.memory_space<vmem>>, %arg8: memref<32x96xf32, #tpu.memory_space<vmem>>, %arg9: memref<1x96xf32, #tpu.memory_space<vmem>>, %arg10: memref<32x16xf32, #tpu.memory_space<vmem>>, %arg11: memref<1x16xf32, #tpu.memory_space<vmem>>, %arg12: memref<1x1x2x1x1xf32, #tpu.memory_space<vmem>>, %arg13: memref<1x2x8x32xf32, #tpu.memory_space<vmem>>, %arg14: memref<1x2x8x32xf32, #tpu.memory_space<vmem>>, %arg15: memref<2x8x32xf32, #tpu.memory_space<vmem>>, %arg16: memref<2x8x32xf32, #tpu.memory_space<vmem>>, %arg17: memref<2x1x1xf32, #tpu.memory_space<vmem>>, %arg18: memref<2x1x1xf32, #tpu.memory_space<vmem>>) attributes {dimension_semantics = [#tpu.dimension_semantics<parallel>, #tpu.dimension_semantics<arbitrary>], iteration_bounds = array<i64: 1, 3>, scalar_prefetch = 1 : i64, scratch_operands = 4 : i64, tpu.core_type = #tpu.core_type<tc>, window_params = [{transform_indices = @transform_0, window_bounds = array<i64: 1, 8, 32>}, {transform_indices = @transform_1, window_bounds = array<i64: 1, 8, 8>}, {transform_indices = @transform_2, window_bounds = array<i64: 2, 16, 32>}, {pipeline_mode = #tpu.pipeline_mode<synchronous>, transform_indices = @transform_3, window_bounds = array<i64: 4, 32>}, {pipeline_mode = #tpu.pipeline_mode<synchronous>, transform_indices = @transform_4, window_bounds = array<i64: 1, 32>}, {pipeline_mode = #tpu.pipeline_mode<synchronous>, transform_indices = @transform_5, window_bounds = array<i64: 32, 96>}, {pipeline_mode = #tpu.pipeline_mode<synchronous>, transform_indices = @transform_6, window_bounds = array<i64: 1, 96>}, {pipeline_mode = #tpu.pipeline_mode<synchronous>, transform_indices = @transform_7, window_bounds = array<i64: 32, 16>}, {pipeline_mode = #tpu.pipeline_mode<synchronous>, transform_indices = @transform_8, window_bounds = array<i64: 1, 16>}, {transform_indices = @transform_9, window_bounds = array<i64: 1, 1, 2, 1, 1>}, {transform_indices = @transform_10, window_bounds = array<i64: 1, 2, 8, 32>}, {transform_indices = @transform_11, window_bounds = array<i64: 1, 2, 8, 32>}]} {
    %0 = arith.index_cast %arg1 : i32 to index
    %1 = memref.load %arg2[%0] : memref<3xi32, #tpu.memory_space<smem>>
    %2 = arith.sitofp %1 : i32 to f32
    %c0 = arith.constant 0 : index
    %c0_0 = arith.constant 0 : index
    %c0_1 = arith.constant 0 : index
    %3 = vector.load %arg4[%c0, %c0_0, %c0_1] : memref<1x8x8xf32, #tpu.memory_space<vmem>>, vector<1x8x8xf32>
    %4 = vector.shape_cast %3 : vector<1x8x8xf32> to vector<8x8xf32>
    %c0_2 = arith.constant 0 : index
    %c0_3 = arith.constant 0 : index
    %c0_4 = arith.constant 0 : index
    %5 = vector.load %arg5[%c0_2, %c0_3, %c0_4] : memref<2x16x32xbf16, #tpu.memory_space<vmem>>, vector<2x16x32xbf16>
    %6 = tpu.iota {dimensions = array<i32: 0>} : vector<8x1xi32>
    %7 = tpu.iota {dimensions = array<i32: 1>} : vector<1x8xi32>
    %8 = vector.broadcast %1 : i32 to vector<8x1xi32>
    %9 = arith.cmpi slt, %6, %8 : vector<8x1xi32>
    %10 = arith.extui %9 : vector<8x1xi1> to vector<8x1xi32>
    %11 = arith.sitofp %10 : vector<8x1xi32> to vector<8x1xf32>
    %12 = vector.broadcast %1 : i32 to vector<1x8xi32>
    %13 = arith.cmpi slt, %7, %12 : vector<1x8xi32>
    %c0_5 = arith.constant 0 : index
    %c0_6 = arith.constant 0 : index
    %c0_7 = arith.constant 0 : index
    %14 = vector.load %arg3[%c0_5, %c0_6, %c0_7] : memref<1x8x32xbf16, #tpu.memory_space<vmem>>, vector<1x8x32xbf16>
    %15 = vector.shape_cast %14 : vector<1x8x32xbf16> to vector<8x32xbf16>
    %16 = arith.extf %15 : vector<8x32xbf16> to vector<8x32xf32>
    %17 = vector.broadcast %11 : vector<8x1xf32> to vector<8x32xf32>
    %18 = arith.mulf %16, %17 : vector<8x32xf32>
    %19 = arith.truncf %18 : vector<8x32xf32> to vector<8x32xbf16>
    %cst = arith.constant dense<0.000000e+00> : vector<8x8xf32>
    %20 = tpu.matmul %19, %19, %cst {dimension_numbers = #tpu.dot_dimension_numbers<[1], [1], [0], [0], [0, 0, 1, 0], [], []>} : vector<8x32xbf16>, vector<8x32xbf16>, vector<8x8xf32> -> vector<8x8xf32>
    %cst_8 = arith.constant 4.000000e+00 : f32
    %21 = vector.broadcast %cst_8 : f32 to vector<8x8xf32>
    %22 = arith.mulf %20, %21 : vector<8x8xf32>
    %cst_9 = arith.constant -1.000000e+30 : f32
    %23 = vector.shape_cast %13 : vector<1x8xi1> to vector<1x8xi1>
    %24 = vector.broadcast %23 : vector<1x8xi1> to vector<8x8xi1>
    %25 = vector.broadcast %cst_9 : f32 to vector<8x8xf32>
    %26 = arith.select %24, %22, %25 : vector<8x8xi1>, vector<8x8xf32>
    %cst_10 = arith.constant dense<0xFF800000> : vector<8xf32>
    %27 = vector.multi_reduction <maximumf>, %26, %cst_10 [1] : vector<8x8xf32> to vector<8xf32>
    %28 = vector.shape_cast %27 : vector<8xf32> to vector<8x1xf32>
    %29 = vector.broadcast %28 : vector<8x1xf32> to vector<8x8xf32>
    %30 = arith.subf %26, %29 : vector<8x8xf32>
    %31 = math.exp %30 : vector<8x8xf32>
    %cst_11 = arith.constant dense<0.000000e+00> : vector<8xf32>
    %32 = vector.multi_reduction <add>, %31, %cst_11 [1] : vector<8x8xf32> to vector<8xf32>
    %33 = vector.shape_cast %32 : vector<8xf32> to vector<8x1xf32>
    %34 = tpu.reciprocal %33 {approx = true} : vector<8x1xf32> -> vector<8x1xf32>
    %35 = vector.broadcast %34 : vector<8x1xf32> to vector<8x8xf32>
    %36 = arith.mulf %31, %35 : vector<8x8xf32>
    %37 = arith.mulf %4, %36 : vector<8x8xf32>
    %38 = arith.mulf %37, %37 : vector<8x8xf32>
    %cst_12 = arith.constant dense<0.000000e+00> : vector<8xf32>
    %39 = vector.multi_reduction <add>, %38, %cst_12 [1] : vector<8x8xf32> to vector<8xf32>
    %40 = vector.shape_cast %39 : vector<8xf32> to vector<8x1xf32>
    %41 = math.sqrt %40 : vector<8x1xf32>
    %cst_13 = arith.constant 9.99999993E-9 : f32
    %42 = vector.broadcast %cst_13 : f32 to vector<8x1xf32>
    %43 = arith.addf %41, %42 : vector<8x1xf32>
    %44 = vector.broadcast %43 : vector<8x1xf32> to vector<8x8xf32>
    %45 = arith.divf %37, %44 : vector<8x8xf32>
    %46 = arith.mulf %45, %4 : vector<8x8xf32>
    %cst_14 = arith.constant dense<0.000000e+00> : vector<8xf32>
    %47 = vector.multi_reduction <add>, %46, %cst_14 [1] : vector<8x8xf32> to vector<8xf32>
    %48 = vector.shape_cast %47 : vector<8xf32> to vector<8x1xf32>
    %49 = vector.shape_cast %19 : vector<8x32xbf16> to vector<1x8x32xbf16>
    %50 = vector.shape_cast %49 : vector<1x8x32xbf16> to vector<1x8x32xbf16>
    %51 = vector.broadcast %50 : vector<1x8x32xbf16> to vector<2x8x32xbf16>
    "tpu.trace_start"() <{level = 10 : i32, message = "bwd,brd->bwr"}> : () -> ()
    %cst_15 = arith.constant dense<0.000000e+00> : vector<2x8x16xf32>
    %52 = tpu.matmul %51, %5, %cst_15 {dimension_numbers = #tpu.dot_dimension_numbers<[2], [2], [1], [1], [0, 0, 0, 1, 1, 1], [0], [0]>} : vector<2x8x32xbf16>, vector<2x16x32xbf16>, vector<2x8x16xf32> -> vector<2x8x16xf32>
    %cst_16 = arith.constant 0.000000e+00 : f32
    "tpu.trace_stop"() : () -> ()
    %53 = vector.broadcast %cst_16 : f32 to vector<2x8x16xf32>
    %54 = arith.cmpf oge, %52, %53 : vector<2x8x16xf32>
    %cst_17 = arith.constant 1.000000e-01 : f32
    %55 = vector.broadcast %cst_17 : f32 to vector<2x8x16xf32>
    %56 = arith.mulf %55, %52 : vector<2x8x16xf32>
    %57 = arith.select %54, %52, %56 : vector<2x8x16xi1>, vector<2x8x16xf32>
    %58 = arith.mulf %57, %57 : vector<2x8x16xf32>
    %cst_18 = arith.constant dense<0.000000e+00> : vector<2x16xf32>
    %59 = vector.multi_reduction <add>, %58, %cst_18 [1] : vector<2x8x16xf32> to vector<2x16xf32>
    %60 = vector.shape_cast %59 : vector<2x16xf32> to vector<2x1x16xf32>
    %61 = math.sqrt %60 : vector<2x1x16xf32>
    %cst_19 = arith.constant 9.99999993E-9 : f32
    %62 = vector.broadcast %cst_19 : f32 to vector<2x1x16xf32>
    %63 = arith.addf %61, %62 : vector<2x1x16xf32>
    %64 = vector.broadcast %63 : vector<2x1x16xf32> to vector<2x8x16xf32>
    %65 = arith.divf %57, %64 : vector<2x8x16xf32>
    %cst_20 = arith.constant 4.000000e+00 : f32
    %66 = vector.broadcast %cst_20 : f32 to vector<2x8x16xf32>
    %67 = arith.mulf %65, %66 : vector<2x8x16xf32>
    %cst_21 = arith.constant dense<0xFF800000> : vector<2x8xf32>
    %68 = vector.multi_reduction <maximumf>, %67, %cst_21 [2] : vector<2x8x16xf32> to vector<2x8xf32>
    %69 = vector.shape_cast %68 : vector<2x8xf32> to vector<2x8x1xf32>
    %70 = vector.broadcast %69 : vector<2x8x1xf32> to vector<2x8x16xf32>
    %71 = arith.subf %67, %70 : vector<2x8x16xf32>
    %72 = math.exp %71 : vector<2x8x16xf32>
    %cst_22 = arith.constant dense<0.000000e+00> : vector<2x8xf32>
    %73 = vector.multi_reduction <add>, %72, %cst_22 [2] : vector<2x8x16xf32> to vector<2x8xf32>
    %74 = vector.shape_cast %73 : vector<2x8xf32> to vector<2x8x1xf32>
    %75 = tpu.reciprocal %74 {approx = true} : vector<2x8x1xf32> -> vector<2x8x1xf32>
    %76 = vector.broadcast %75 : vector<2x8x1xf32> to vector<2x8x16xf32>
    %77 = arith.mulf %72, %76 : vector<2x8x16xf32>
    %78 = arith.truncf %77 : vector<2x8x16xf32> to vector<2x8x16xbf16>
    "tpu.trace_start"() <{level = 10 : i32, message = "bwr,brd->bwd"}> : () -> ()
    %cst_23 = arith.constant dense<0.000000e+00> : vector<2x8x32xf32>
    %79 = tpu.matmul %78, %5, %cst_23 {dimension_numbers = #tpu.dot_dimension_numbers<[2], [1], [1], [2], [0, 0, 0, 1, 1, 2], [0], [0]>} : vector<2x8x16xbf16>, vector<2x16x32xbf16>, vector<2x8x32xf32> -> vector<2x8x32xf32>
    "tpu.trace_stop"() : () -> ()
    %80 = tpu.iota {dimensions = array<i32: 0>} : vector<32x4xi32>
    %81 = tpu.iota {dimensions = array<i32: 1>} : vector<32x4xi32>
    %c8_i32 = arith.constant 8 : i32
    %82 = vector.broadcast %c8_i32 : i32 to vector<32x4xi32>
    %83 = arith.muli %81, %82 : vector<32x4xi32>
    %84 = arith.cmpi sge, %80, %83 : vector<32x4xi32>
    %c1_i32 = arith.constant 1 : i32
    %85 = vector.broadcast %c1_i32 : i32 to vector<32x4xi32>
    %86 = arith.addi %81, %85 : vector<32x4xi32>
    %c8_i32_24 = arith.constant 8 : i32
    %87 = vector.broadcast %c8_i32_24 : i32 to vector<32x4xi32>
    %88 = arith.muli %86, %87 : vector<32x4xi32>
    %89 = arith.cmpi slt, %80, %88 : vector<32x4xi32>
    %90 = arith.andi %84, %89 : vector<32x4xi1>
    %91 = arith.extui %90 : vector<32x4xi1> to vector<32x4xi32>
    %92 = arith.sitofp %91 : vector<32x4xi32> to vector<32x4xf32>
    %93 = vector.shape_cast %18 : vector<8x32xf32> to vector<1x8x32xf32>
    %94 = vector.shape_cast %93 : vector<1x8x32xf32> to vector<1x8x32xf32>
    %95 = vector.broadcast %94 : vector<1x8x32xf32> to vector<2x8x32xf32>
    %96 = vector.shape_cast %95 : vector<2x8x32xf32> to vector<16x32xf32>
    %97 = vector.shape_cast %79 : vector<2x8x32xf32> to vector<16x32xf32>
    %98 = arith.mulf %96, %97 : vector<16x32xf32>
    %cst_25 = arith.constant dense<0.000000e+00> : vector<16x4xf32>
    %99 = tpu.matmul %98, %92, %cst_25 {dimension_numbers = #tpu.dot_dimension_numbers<[1], [0], [0], [1], [0, 0, 1, 1], [], []>} : vector<16x32xf32>, vector<32x4xf32>, vector<16x4xf32> -> vector<16x4xf32>
    %100 = arith.mulf %96, %96 : vector<16x32xf32>
    %cst_26 = arith.constant dense<0.000000e+00> : vector<16x4xf32>
    %101 = tpu.matmul %100, %92, %cst_26 {dimension_numbers = #tpu.dot_dimension_numbers<[1], [0], [0], [1], [0, 0, 1, 1], [], []>} : vector<16x32xf32>, vector<32x4xf32>, vector<16x4xf32> -> vector<16x4xf32>
    %102 = arith.mulf %97, %97 : vector<16x32xf32>
    %cst_27 = arith.constant dense<0.000000e+00> : vector<16x4xf32>
    %103 = tpu.matmul %102, %92, %cst_27 {dimension_numbers = #tpu.dot_dimension_numbers<[1], [0], [0], [1], [0, 0, 1, 1], [], []>} : vector<16x32xf32>, vector<32x4xf32>, vector<16x4xf32> -> vector<16x4xf32>
    %104 = arith.mulf %101, %103 : vector<16x4xf32>
    %105 = math.sqrt %104 : vector<16x4xf32>
    %cst_28 = arith.constant 9.99999993E-9 : f32
    %106 = vector.broadcast %cst_28 : f32 to vector<16x4xf32>
    %107 = arith.maximumf %105, %106 : vector<16x4xf32>
    %108 = arith.divf %99, %107 : vector<16x4xf32>
    %109 = vector.shape_cast %48 : vector<8x1xf32> to vector<1x8x1xf32>
    %110 = vector.shape_cast %109 : vector<1x8x1xf32> to vector<1x8x1xf32>
    %111 = vector.broadcast %110 : vector<1x8x1xf32> to vector<2x8x1xf32>
    %112 = vector.shape_cast %111 : vector<2x8x1xf32> to vector<16x1xf32>
    %113 = vector.broadcast %112 : vector<16x1xf32> to vector<16x4xf32>
    %114 = arith.mulf %108, %113 : vector<16x4xf32>
    %c0_29 = arith.constant 0 : index
    %c0_30 = arith.constant 0 : index
    %115 = vector.load %arg6[%c0_29, %c0_30] : memref<4x32xf32, #tpu.memory_space<vmem>>, vector<4x32xf32>
    %cst_31 = arith.constant dense<0.000000e+00> : vector<16x32xf32>
    %116 = tpu.matmul %114, %115, %cst_31 {dimension_numbers = #tpu.dot_dimension_numbers<[1], [0], [0], [1], [0, 0, 1, 1], [], []>} : vector<16x4xf32>, vector<4x32xf32>, vector<16x32xf32> -> vector<16x32xf32>
    %c0_32 = arith.constant 0 : index
    %c0_33 = arith.constant 0 : index
    %117 = vector.load %arg7[%c0_32, %c0_33] : memref<1x32xf32, #tpu.memory_space<vmem>>, vector<1x32xf32>
    %118 = vector.broadcast %117 : vector<1x32xf32> to vector<16x32xf32>
    %119 = arith.addf %116, %118 : vector<16x32xf32>
    %cst_34 = arith.constant 0.000000e+00 : f32
    %120 = vector.broadcast %cst_34 : f32 to vector<16x32xf32>
    %121 = arith.maximumf %119, %120 : vector<16x32xf32>
    %c0_35 = arith.constant 0 : index
    %c0_36 = arith.constant 0 : index
    %122 = vector.load %arg8[%c0_35, %c0_36] : memref<32x96xf32, #tpu.memory_space<vmem>>, vector<32x96xf32>
    %cst_37 = arith.constant dense<0.000000e+00> : vector<16x96xf32>
    %123 = tpu.matmul %121, %122, %cst_37 {dimension_numbers = #tpu.dot_dimension_numbers<[1], [0], [0], [1], [0, 0, 1, 1], [], []>} : vector<16x32xf32>, vector<32x96xf32>, vector<16x96xf32> -> vector<16x96xf32>
    %c0_38 = arith.constant 0 : index
    %c0_39 = arith.constant 0 : index
    %124 = vector.load %arg9[%c0_38, %c0_39] : memref<1x96xf32, #tpu.memory_space<vmem>>, vector<1x96xf32>
    %125 = vector.broadcast %124 : vector<1x96xf32> to vector<16x96xf32>
    %126 = arith.addf %123, %125 : vector<16x96xf32>
    %127 = vector.extract_strided_slice %126 {offsets = [0, 0], sizes = [16, 32], strides = [1, 1]} : vector<16x96xf32> to vector<16x32xf32>
    %128 = vector.extract_strided_slice %126 {offsets = [0, 32], sizes = [16, 32], strides = [1, 1]} : vector<16x96xf32> to vector<16x32xf32>
    %cst_40 = arith.constant 5.000000e-01 : f32
    %129 = vector.broadcast %cst_40 : f32 to vector<16x32xf32>
    %130 = arith.mulf %129, %128 : vector<16x32xf32>
    %131 = math.exp %130 : vector<16x32xf32>
    %132 = vector.extract_strided_slice %126 {offsets = [0, 64], sizes = [16, 32], strides = [1, 1]} : vector<16x96xf32> to vector<16x32xf32>
    %133 = math.tanh %132 : vector<16x32xf32>
    %c0_41 = arith.constant 0 : index
    %c0_42 = arith.constant 0 : index
    %134 = vector.load %arg10[%c0_41, %c0_42] : memref<32x16xf32, #tpu.memory_space<vmem>>, vector<32x16xf32>
    %cst_43 = arith.constant dense<0.000000e+00> : vector<16x16xf32>
    %135 = tpu.matmul %133, %134, %cst_43 {dimension_numbers = #tpu.dot_dimension_numbers<[1], [0], [0], [1], [0, 0, 1, 1], [], []>} : vector<16x32xf32>, vector<32x16xf32>, vector<16x16xf32> -> vector<16x16xf32>
    %c0_44 = arith.constant 0 : index
    %c0_45 = arith.constant 0 : index
    %136 = vector.load %arg11[%c0_44, %c0_45] : memref<1x16xf32, #tpu.memory_space<vmem>>, vector<1x16xf32>
    %137 = vector.broadcast %136 : vector<1x16xf32> to vector<16x16xf32>
    %138 = arith.addf %135, %137 : vector<16x16xf32>
    %139 = vector.shape_cast %11 : vector<8x1xf32> to vector<1x8x1xf32>
    %140 = vector.shape_cast %138 : vector<16x16xf32> to vector<2x8x16xf32>
    %141 = vector.broadcast %139 : vector<1x8x1xf32> to vector<2x8x16xf32>
    %142 = arith.mulf %140, %141 : vector<2x8x16xf32>
    %cst_46 = arith.constant dense<0.000000e+00> : vector<2x8xf32>
    %143 = vector.multi_reduction <add>, %142, %cst_46 [2] : vector<2x8x16xf32> to vector<2x8xf32>
    %144 = vector.shape_cast %143 : vector<2x8xf32> to vector<2x8x1xf32>
    %cst_47 = arith.constant dense<0.000000e+00> : vector<2x1xf32>
    %145 = vector.multi_reduction <add>, %144, %cst_47 [1] : vector<2x8x1xf32> to vector<2x1xf32>
    %146 = vector.shape_cast %145 : vector<2x1xf32> to vector<2x1x1xf32>
    %cst_48 = arith.constant 1.600000e+01 : f32
    %147 = arith.mulf %2, %cst_48 : f32
    %148 = vector.broadcast %147 : f32 to vector<2x1x1xf32>
    %149 = arith.divf %146, %148 : vector<2x1x1xf32>
    %c0_49 = arith.constant 0 : index
    %c0_50 = arith.constant 0 : index
    %c0_51 = arith.constant 0 : index
    %c0_52 = arith.constant 0 : index
    %c0_53 = arith.constant 0 : index
    %150 = vector.load %arg12[%c0_49, %c0_50, %c0_51, %c0_52, %c0_53] : memref<1x1x2x1x1xf32, #tpu.memory_space<vmem>>, vector<1x1x2x1x1xf32>
    %151 = vector.shape_cast %150 : vector<1x1x2x1x1xf32> to vector<2x1x1xf32>
    %152 = vector.shape_cast %149 : vector<2x1x1xf32> to vector<1x1x2x1x1xf32>
    tpu.vector_store %arg12[%c0_49, %c0_50, %c0_51, %c0_52, %c0_53], %152 {strides = array<i32>} : memref<1x1x2x1x1xf32, #tpu.memory_space<vmem>>, vector<1x1x2x1x1xf32>,
    %153 = vector.shape_cast %127 : vector<16x32xf32> to vector<2x8x32xf32>
    %154 = vector.broadcast %139 : vector<1x8x1xf32> to vector<2x8x32xf32>
    %155 = arith.mulf %153, %154 : vector<2x8x32xf32>
    %156 = vector.shape_cast %131 : vector<16x32xf32> to vector<2x8x32xf32>
    %157 = vector.broadcast %139 : vector<1x8x1xf32> to vector<2x8x32xf32>
    %158 = arith.mulf %156, %157 : vector<2x8x32xf32>
    %c0_i32 = arith.constant 0 : i32
    %159 = arith.cmpi eq, %arg1, %c0_i32 : i32
    %160 = arith.extui %159 : i1 to i32
    %c0_i32_54 = arith.constant 0 : i32
    %161 = arith.cmpi ne, %160, %c0_i32_54 : i32
    scf.if %161 {
      %cst_80 = arith.constant -1.000000e+30 : f32
      %193 = vector.broadcast %cst_80 : f32 to vector<2x1x1xf32>
      %c0_81 = arith.constant 0 : index
      %c0_82 = arith.constant 0 : index
      %c0_83 = arith.constant 0 : index
      %194 = vector.load %arg17[%c0_81, %c0_82, %c0_83] : memref<2x1x1xf32, #tpu.memory_space<vmem>>, vector<2x1x1xf32>
      tpu.vector_store %arg17[%c0_81, %c0_82, %c0_83], %193 {strides = array<i32>} : memref<2x1x1xf32, #tpu.memory_space<vmem>>, vector<2x1x1xf32>,
      %cst_84 = arith.constant 0.000000e+00 : f32
      %195 = vector.broadcast %cst_84 : f32 to vector<2x1x1xf32>
      %c0_85 = arith.constant 0 : index
      %c0_86 = arith.constant 0 : index
      %c0_87 = arith.constant 0 : index
      %196 = vector.load %arg18[%c0_85, %c0_86, %c0_87] : memref<2x1x1xf32, #tpu.memory_space<vmem>>, vector<2x1x1xf32>
      tpu.vector_store %arg18[%c0_85, %c0_86, %c0_87], %195 {strides = array<i32>} : memref<2x1x1xf32, #tpu.memory_space<vmem>>, vector<2x1x1xf32>,
      %cst_88 = arith.constant 0.000000e+00 : f32
      %197 = vector.broadcast %cst_88 : f32 to vector<2x8x32xf32>
      %c0_89 = arith.constant 0 : index
      %c0_90 = arith.constant 0 : index
      %c0_91 = arith.constant 0 : index
      %198 = vector.load %arg15[%c0_89, %c0_90, %c0_91] : memref<2x8x32xf32, #tpu.memory_space<vmem>>, vector<2x8x32xf32>
      tpu.vector_store %arg15[%c0_89, %c0_90, %c0_91], %197 {strides = array<i32>} : memref<2x8x32xf32, #tpu.memory_space<vmem>>, vector<2x8x32xf32>,
      %cst_92 = arith.constant 0.000000e+00 : f32
      %199 = vector.broadcast %cst_92 : f32 to vector<2x8x32xf32>
      %c0_93 = arith.constant 0 : index
      %c0_94 = arith.constant 0 : index
      %c0_95 = arith.constant 0 : index
      %200 = vector.load %arg16[%c0_93, %c0_94, %c0_95] : memref<2x8x32xf32, #tpu.memory_space<vmem>>, vector<2x8x32xf32>
      tpu.vector_store %arg16[%c0_93, %c0_94, %c0_95], %199 {strides = array<i32>} : memref<2x8x32xf32, #tpu.memory_space<vmem>>, vector<2x8x32xf32>,
    } else {
    }
    %c0_55 = arith.constant 0 : index
    %c0_56 = arith.constant 0 : index
    %c0_57 = arith.constant 0 : index
    %162 = vector.load %arg17[%c0_55, %c0_56, %c0_57] : memref<2x1x1xf32, #tpu.memory_space<vmem>>, vector<2x1x1xf32>
    %163 = arith.maximumf %162, %149 : vector<2x1x1xf32>
    %164 = arith.subf %162, %163 : vector<2x1x1xf32>
    %165 = math.exp %164 : vector<2x1x1xf32>
    %166 = arith.subf %149, %163 : vector<2x1x1xf32>
    %167 = math.exp %166 : vector<2x1x1xf32>
    %c0_58 = arith.constant 0 : index
    %c0_59 = arith.constant 0 : index
    %c0_60 = arith.constant 0 : index
    %168 = vector.load %arg18[%c0_58, %c0_59, %c0_60] : memref<2x1x1xf32, #tpu.memory_space<vmem>>, vector<2x1x1xf32>
    %169 = arith.mulf %165, %168 : vector<2x1x1xf32>
    %170 = arith.addf %169, %167 : vector<2x1x1xf32>
    %c0_61 = arith.constant 0 : index
    %c0_62 = arith.constant 0 : index
    %c0_63 = arith.constant 0 : index
    %171 = vector.load %arg18[%c0_61, %c0_62, %c0_63] : memref<2x1x1xf32, #tpu.memory_space<vmem>>, vector<2x1x1xf32>
    tpu.vector_store %arg18[%c0_61, %c0_62, %c0_63], %170 {strides = array<i32>} : memref<2x1x1xf32, #tpu.memory_space<vmem>>, vector<2x1x1xf32>,
    %c0_64 = arith.constant 0 : index
    %c0_65 = arith.constant 0 : index
    %c0_66 = arith.constant 0 : index
    %172 = vector.load %arg15[%c0_64, %c0_65, %c0_66] : memref<2x8x32xf32, #tpu.memory_space<vmem>>, vector<2x8x32xf32>
    %173 = vector.broadcast %165 : vector<2x1x1xf32> to vector<2x8x32xf32>
    %174 = arith.mulf %173, %172 : vector<2x8x32xf32>
    %175 = vector.broadcast %167 : vector<2x1x1xf32> to vector<2x8x32xf32>
    %176 = arith.mulf %175, %155 : vector<2x8x32xf32>
    %177 = arith.addf %174, %176 : vector<2x8x32xf32>
    %c0_67 = arith.constant 0 : index
    %c0_68 = arith.constant 0 : index
    %c0_69 = arith.constant 0 : index
    %178 = vector.load %arg15[%c0_67, %c0_68, %c0_69] : memref<2x8x32xf32, #tpu.memory_space<vmem>>, vector<2x8x32xf32>
    tpu.vector_store %arg15[%c0_67, %c0_68, %c0_69], %177 {strides = array<i32>} : memref<2x8x32xf32, #tpu.memory_space<vmem>>, vector<2x8x32xf32>,
    %c0_70 = arith.constant 0 : index
    %c0_71 = arith.constant 0 : index
    %c0_72 = arith.constant 0 : index
    %179 = vector.load %arg16[%c0_70, %c0_71, %c0_72] : memref<2x8x32xf32, #tpu.memory_space<vmem>>, vector<2x8x32xf32>
    %180 = vector.broadcast %165 : vector<2x1x1xf32> to vector<2x8x32xf32>
    %181 = arith.mulf %180, %179 : vector<2x8x32xf32>
    %182 = arith.mulf %158, %158 : vector<2x8x32xf32>
    %183 = arith.mulf %155, %155 : vector<2x8x32xf32>
    %184 = arith.addf %182, %183 : vector<2x8x32xf32>
    %185 = vector.broadcast %167 : vector<2x1x1xf32> to vector<2x8x32xf32>
    %186 = arith.mulf %185, %184 : vector<2x8x32xf32>
    %187 = arith.addf %181, %186 : vector<2x8x32xf32>
    %c0_73 = arith.constant 0 : index
    %c0_74 = arith.constant 0 : index
    %c0_75 = arith.constant 0 : index
    %188 = vector.load %arg16[%c0_73, %c0_74, %c0_75] : memref<2x8x32xf32, #tpu.memory_space<vmem>>, vector<2x8x32xf32>
    tpu.vector_store %arg16[%c0_73, %c0_74, %c0_75], %187 {strides = array<i32>} : memref<2x8x32xf32, #tpu.memory_space<vmem>>, vector<2x8x32xf32>,
    %c0_76 = arith.constant 0 : index
    %c0_77 = arith.constant 0 : index
    %c0_78 = arith.constant 0 : index
    %189 = vector.load %arg17[%c0_76, %c0_77, %c0_78] : memref<2x1x1xf32, #tpu.memory_space<vmem>>, vector<2x1x1xf32>
    tpu.vector_store %arg17[%c0_76, %c0_77, %c0_78], %163 {strides = array<i32>} : memref<2x1x1xf32, #tpu.memory_space<vmem>>, vector<2x1x1xf32>,
    %c2_i32 = arith.constant 2 : i32
    %190 = arith.cmpi eq, %arg1, %c2_i32 : i32
    %191 = arith.extui %190 : i1 to i32
    %c0_i32_79 = arith.constant 0 : i32
    %192 = arith.cmpi ne, %191, %c0_i32_79 : i32
    scf.if %192 {
      %c0_80 = arith.constant 0 : index
      %c0_81 = arith.constant 0 : index
      %c0_82 = arith.constant 0 : index
      %193 = vector.load %arg18[%c0_80, %c0_81, %c0_82] : memref<2x1x1xf32, #tpu.memory_space<vmem>>, vector<2x1x1xf32>
      %cst_83 = arith.constant 1.000000e+00 : f32
      %194 = vector.broadcast %cst_83 : f32 to vector<2x1x1xf32>
      %195 = arith.divf %194, %193 : vector<2x1x1xf32>
      %c0_84 = arith.constant 0 : index
      %c0_85 = arith.constant 0 : index
      %c0_86 = arith.constant 0 : index
      %196 = vector.load %arg15[%c0_84, %c0_85, %c0_86] : memref<2x8x32xf32, #tpu.memory_space<vmem>>, vector<2x8x32xf32>
      %197 = vector.broadcast %195 : vector<2x1x1xf32> to vector<2x8x32xf32>
      %198 = arith.mulf %196, %197 : vector<2x8x32xf32>
      %c0_87 = arith.constant 0 : index
      %c0_88 = arith.constant 0 : index
      %c0_89 = arith.constant 0 : index
      %199 = vector.load %arg16[%c0_87, %c0_88, %c0_89] : memref<2x8x32xf32, #tpu.memory_space<vmem>>, vector<2x8x32xf32>
      %200 = vector.broadcast %195 : vector<2x1x1xf32> to vector<2x8x32xf32>
      %201 = arith.mulf %199, %200 : vector<2x8x32xf32>
      %202 = arith.mulf %198, %198 : vector<2x8x32xf32>
      %203 = arith.subf %201, %202 : vector<2x8x32xf32>
      %c0_90 = arith.constant 0 : index
      %c0_91 = arith.constant 0 : index
      %c0_92 = arith.constant 0 : index
      %c0_93 = arith.constant 0 : index
      %204 = vector.load %arg13[%c0_90, %c0_91, %c0_92, %c0_93] : memref<1x2x8x32xf32, #tpu.memory_space<vmem>>, vector<1x2x8x32xf32>
      %205 = vector.shape_cast %204 : vector<1x2x8x32xf32> to vector<2x8x32xf32>
      %206 = vector.shape_cast %198 : vector<2x8x32xf32> to vector<1x2x8x32xf32>
      tpu.vector_store %arg13[%c0_90, %c0_91, %c0_92, %c0_93], %206 {strides = array<i32>} : memref<1x2x8x32xf32, #tpu.memory_space<vmem>>, vector<1x2x8x32xf32>,
      %cst_94 = arith.constant 9.99999993E-9 : f32
      %207 = vector.broadcast %cst_94 : f32 to vector<2x8x32xf32>
      %208 = arith.maximumf %203, %207 : vector<2x8x32xf32>
      %209 = math.sqrt %208 : vector<2x8x32xf32>
      %c0_95 = arith.constant 0 : index
      %c0_96 = arith.constant 0 : index
      %c0_97 = arith.constant 0 : index
      %c0_98 = arith.constant 0 : index
      %210 = vector.load %arg14[%c0_95, %c0_96, %c0_97, %c0_98] : memref<1x2x8x32xf32, #tpu.memory_space<vmem>>, vector<1x2x8x32xf32>
      %211 = vector.shape_cast %210 : vector<1x2x8x32xf32> to vector<2x8x32xf32>
      %212 = vector.shape_cast %209 : vector<2x8x32xf32> to vector<1x2x8x32xf32>
      tpu.vector_store %arg14[%c0_95, %c0_96, %c0_97, %c0_98], %212 {strides = array<i32>} : memref<1x2x8x32xf32, #tpu.memory_space<vmem>>, vector<1x2x8x32xf32>,
    } else {
    }
    return
  }
  func.func @transform_0(%arg0: i32, %arg1: i32, %arg2: memref<3xi32, #tpu.memory_space<smem>>) -> (i32, i32, i32) {
    %c0_i32 = arith.constant 0 : i32
    %c0_i32_0 = arith.constant 0 : i32
    %c0_i32_1 = arith.constant 0 : i32
    return %arg1, %c0_i32, %c0_i32_0 : i32, i32, i32
  }
  func.func @transform_1(%arg0: i32, %arg1: i32, %arg2: memref<3xi32, #tpu.memory_space<smem>>) -> (i32, i32, i32) {
    %c0_i32 = arith.constant 0 : i32
    %c0_i32_0 = arith.constant 0 : i32
    %c0_i32_1 = arith.constant 0 : i32
    return %arg1, %c0_i32, %c0_i32_0 : i32, i32, i32
  }
  func.func @transform_2(%arg0: i32, %arg1: i32, %arg2: memref<3xi32, #tpu.memory_space<smem>>) -> (i32, i32, i32) {
    %c0_i32 = arith.constant 0 : i32
    %c0_i32_0 = arith.constant 0 : i32
    %c0_i32_1 = arith.constant 0 : i32
    return %arg0, %c0_i32, %c0_i32_0 : i32, i32, i32
  }
  func.func @transform_3(%arg0: i32, %arg1: i32, %arg2: memref<3xi32, #tpu.memory_space<smem>>) -> (i32, i32) {
    %c0_i32 = arith.constant 0 : i32
    %c0_i32_0 = arith.constant 0 : i32
    %c0_i32_1 = arith.constant 0 : i32
    return %c0_i32, %c0_i32_0 : i32, i32
  }
  func.func @transform_4(%arg0: i32, %arg1: i32, %arg2: memref<3xi32, #tpu.memory_space<smem>>) -> (i32, i32) {
    %c0_i32 = arith.constant 0 : i32
    %c0_i32_0 = arith.constant 0 : i32
    %c0_i32_1 = arith.constant 0 : i32
    return %c0_i32, %c0_i32_0 : i32, i32
  }
  func.func @transform_5(%arg0: i32, %arg1: i32, %arg2: memref<3xi32, #tpu.memory_space<smem>>) -> (i32, i32) {
    %c0_i32 = arith.constant 0 : i32
    %c0_i32_0 = arith.constant 0 : i32
    %c0_i32_1 = arith.constant 0 : i32
    return %c0_i32, %c0_i32_0 : i32, i32
  }
  func.func @transform_6(%arg0: i32, %arg1: i32, %arg2: memref<3xi32, #tpu.memory_space<smem>>) -> (i32, i32) {
    %c0_i32 = arith.constant 0 : i32
    %c0_i32_0 = arith.constant 0 : i32
    %c0_i32_1 = arith.constant 0 : i32
    return %c0_i32, %c0_i32_0 : i32, i32
  }
  func.func @transform_7(%arg0: i32, %arg1: i32, %arg2: memref<3xi32, #tpu.memory_space<smem>>) -> (i32, i32) {
    %c0_i32 = arith.constant 0 : i32
    %c0_i32_0 = arith.constant 0 : i32
    %c0_i32_1 = arith.constant 0 : i32
    return %c0_i32, %c0_i32_0 : i32, i32
  }
  func.func @transform_8(%arg0: i32, %arg1: i32, %arg2: memref<3xi32, #tpu.memory_space<smem>>) -> (i32, i32) {
    %c0_i32 = arith.constant 0 : i32
    %c0_i32_0 = arith.constant 0 : i32
    %c0_i32_1 = arith.constant 0 : i32
    return %c0_i32, %c0_i32_0 : i32, i32
  }
  func.func @transform_9(%arg0: i32, %arg1: i32, %arg2: memref<3xi32, #tpu.memory_space<smem>>) -> (i32, i32, i32, i32, i32) {
    %c0_i32 = arith.constant 0 : i32
    %c0_i32_0 = arith.constant 0 : i32
    %c0_i32_1 = arith.constant 0 : i32
    %c0_i32_2 = arith.constant 0 : i32
    return %arg1, %arg0, %c0_i32, %c0_i32_0, %c0_i32_1 : i32, i32, i32, i32, i32
  }
  func.func @transform_10(%arg0: i32, %arg1: i32, %arg2: memref<3xi32, #tpu.memory_space<smem>>) -> (i32, i32, i32, i32) {
    %c0_i32 = arith.constant 0 : i32
    %c0_i32_0 = arith.constant 0 : i32
    %c0_i32_1 = arith.constant 0 : i32
    %c0_i32_2 = arith.constant 0 : i32
    return %arg0, %c0_i32, %c0_i32_0, %c0_i32_1 : i32, i32, i32, i32
  }
  func.func @transform_11(%arg0: i32, %arg1: i32, %arg2: memref<3xi32, #tpu.memory_space<smem>>) -> (i32, i32, i32, i32) {
    %c0_i32 = arith.constant 0 : i32
    %c0_i32_0 = arith.constant 0 : i32
    %c0_i32_1 = arith.constant 0 : i32
    %c0_i32_2 = arith.constant 0 : i32
    return %arg0, %c0_i32, %c0_i32_0, %c0_i32_1 : i32, i32, i32, i32
  }
}

</mosaic_0001>

<llo_original>
// kernel: tpu_custom_call.1
$region0: #{tpu_custom_call.1}
  #allocation0 [shape = 'u32[]', space=smem, size = 0x4, offset = 0x4, fixed_abs, tag = 'smem constant byte address 0x4 - core index']
  #allocation1 [shape = 'u32[144,128]{1,0:T(1,128)}', space=vmem, size = 0x12000, scoped, tag = 'internal scratch']
  #allocation2 [shape = 'f32[2,8,32]{2,1,0:T(8,128)}', space=vmem, size = 0x2000, scoped, tag = 'scratch operand']
  #allocation3 [shape = 'f32[2,8,32]{2,1,0:T(8,128)}', space=vmem, size = 0x2000, scoped, tag = 'scratch operand']
  #allocation4 [shape = 'f32[2,1,1]{2,1,0:T(1,128)}', space=vmem, size = 0x400, scoped, tag = 'scratch operand']
  #allocation5 [shape = 'f32[2,1,1]{2,1,0:T(1,128)}', space=vmem, size = 0x400, scoped, tag = 'scratch operand']
  #allocation6 [shape = 's32[1]{0}', space=sflag, size = 0x4, scoped, tag = 'scoped memory for tpu_custom_call.1']
  #allocation7 [shape = 'u8[512]{0}', space=smem, size = 0x200, scoped, tag = 'prefetched SMEM operand 0']
  %s0 = inlined_call_operand.vmem [shape: s32[3], index: 0, kind: input, shape index: {}]
  %s1 = inlined_call_operand.hbm [shape: bf16[3,8,32], index: 1, kind: input, shape index: {}]
  %s2 = inlined_call_operand.vmem [shape: f32[3,8,8], index: 2, kind: input, shape index: {}]
  %s3 = inlined_call_operand.hbm [shape: bf16[2,16,32], index: 3, kind: input, shape index: {}]
  %s4 = inlined_call_operand.hbm [shape: f32[4,32], index: 4, kind: input, shape index: {}]
  %s5 = inlined_call_operand.vmem [shape: f32[1,32], index: 5, kind: input, shape index: {}]
  %s6 = inlined_call_operand.vmem [shape: f32[32,96], index: 6, kind: input, shape index: {}]
  %s7 = inlined_call_operand.vmem [shape: f32[1,96], index: 7, kind: input, shape index: {}]
  %s8 = inlined_call_operand.vmem [shape: f32[32,16], index: 8, kind: input, shape index: {}]
  %s9 = inlined_call_operand.vmem [shape: f32[1,16], index: 9, kind: input, shape index: {}]
  %s10 = inlined_call_operand.vmem [shape: f32[3,1,2,1,1], index: 10, kind: output, shape index: {0}]
  %s11 = inlined_call_operand.hbm [shape: f32[1,2,8,32], index: 11, kind: output, shape index: {1}]
  %s12 = inlined_call_operand.hbm [shape: f32[1,2,8,32], index: 12, kind: output, shape index: {2}]
  %13 = xla_tuple %s10, %s11, %s12
  %s14 = sld [smem:[#allocation0]]
  $region105: #{tpu_custom_call.1} parent=0
    _
  %s16 = ssub.s32 1, %s14
  %s17 = scalar_select 0, %s16, %s14
  %s18 = sshll.u32 %s0, 4
  %s19 = int_to_ptr.vmem [resolvable:$true] %s18
  %21 = dma.vmem_to_smem %s19, 16, [#allocation7], [#allocation6]
  %22 = dma.done [#allocation6], 16
  %23 = sfence
  $region1: #{tpu_custom_call.1} parent=0
    #allocation8 [shape = 'u8[4096]{0}', space=vmem, size = 0x1000, scoped, tag = 'input window, operand 1']
    #allocation9 [shape = 's32[2]{0}', space=sflag, size = 0x8, scoped, tag = 'scoped memory for tpu_custom_call.1']
    #allocation10 [shape = 's32[2]{0}', space=sflag, size = 0x8, scoped, tag = 'scoped memory for tpu_custom_call.1']
    #allocation11 [shape = 'u8[8192]{0}', space=vmem, size = 0x2000, scoped, tag = 'input window, operand 3, single buffered']
    #allocation12 [shape = 's32[1]{0}', space=sflag, size = 0x4, scoped, tag = 'scoped memory for tpu_custom_call.1']
    #allocation13 [shape = 'u8[2048]{0}', space=vmem, size = 0x800, scoped, tag = 'input window, operand 4, single buffered']
    #allocation14 [shape = 'u8[8192]{0}', space=vmem, size = 0x2000, scoped, tag = 'output window, operand 1, single buffered']
    #allocation15 [shape = 'u8[8192]{0}', space=vmem, size = 0x2000, scoped, tag = 'output window, operand 2, single buffered']
    #allocation16 [shape = 's32[1]{0}', space=sflag, size = 0x4, scoped, tag = 'scoped memory for tpu_custom_call.1']
    %24 = vsyncpa [#allocation9], 0
    %s25 = scalar_lea.sflag [#allocation9], 1
    %26 = vsyncpa %s25, 0
    %27 = vsyncpa [#allocation12], 0
    %28 = vsyncpa [#allocation10], 0
    %29 = vsyncpa [#allocation16], 0
    loop: start=0, step=1, limit=5
    $region2: #{tpu_custom_call.1} parent=1 // loop_pre_header
      _
    $region3: #{tpu_custom_call.1} parent=1 // loop_header
      %s31 = sphi 0, %s35
      %p32 = scmp.ge.s32.totalorder %s31, 5
      %s38 = sphi 0, %s50
      %s39 = sphi 0, %s46
      %s40 = sphi 0, %s38
      %s41 = sphi 0, %s39
      %s42 = sphi 0, %s40
      %s43 = sphi 0, %s41
      %s53 = sphi 0, %s55
      %s56 = sphi 0, %s53
      %s57 = sphi 0, %s56
      %s73 = sphi 0, %s57
      %s79 = sphi 0, %s81
      %s82 = sphi 0, %s79
      %s83 = sphi 0, %s82
      %s99 = sphi 0, %s83
      %s105 = sphi 0, %s107
      %s108 = sphi 0, %s105
      %s109 = sphi 0, %s108
      %s125 = sphi 0, %s109
      %s129 = sphi 0, %s129
      %s131 = sphi 0, %s129
      %s132 = sphi 0, %s131
      %s146 = sphi 0, %s132
      %s150 = sphi 0, %s150
      %s152 = sphi 0, %s150
      %s153 = sphi 0, %s152
      %s167 = sphi 0, %s153
      %s171 = sphi 0, %s171
      %s173 = sphi 0, %s171
      %s174 = sphi 0, %s173
      %s188 = sphi 0, %s174
      %s192 = sphi 0, %s192
      %s194 = sphi 0, %s192
      %s195 = sphi 0, %s194
      %s209 = sphi 0, %s195
      %s213 = sphi 0, %s213
      %s215 = sphi 0, %s213
      %s216 = sphi 0, %s215
      %s230 = sphi 0, %s216
      %s234 = sphi 0, %s234
      %s236 = sphi 0, %s234
      %s237 = sphi 0, %s236
      %s251 = sphi 0, %s237
      %s259 = sphi 0, %s261
      %s262 = sphi 0, %s259
      %s263 = sphi 0, %s262
      %s279 = sphi 0, %s263
      %s285 = sphi 0, %s287
      %s288 = sphi 0, %s285
      %s289 = sphi 0, %s288
      %s305 = sphi 0, %s289
      %s311 = sphi 0, %s313
      %s314 = sphi 0, %s311
      %s315 = sphi 0, %s314
      %s331 = sphi 0, %s315
    $region4: #{tpu_custom_call.1} parent=1 // loop_header_branch
      %34 = sbr.rel (%p32) target = $region8
    $region5: #{tpu_custom_call.1} parent=1 // loop_body
      %s36 = ssub.s32 %s31, 1
      %s37 = ssub.s32 %s31, 2
      %s44 = sadd.s32 1, %s39
      %p45 = scmp.ge.s32.totalorder %s44, 3
      %s46 = scalar_select %p45, 0, %s44
      %s47 = sadd.s32 1, %s38
      %s48 = scalar_select %p45, %s47, %s38
      %p49 = scmp.ge.s32.totalorder %s48, 1
      %s50 = scalar_select %p49, 0, %s48
      %s51 = ssub.s32 %s39, %s46
      %p52 = scmp.eq.s32.totalorder %s51, 0
      %s54 = sadd.s32 %s53, 1
      %s55 = scalar_select %p52, %s53, %s54
      %p58 = pneg %p52
      %p59 = scmp.eq.s32.totalorder %s31, 2
      %p60 = por %p58, %p59
      %p61 = scmp.ne.s32.totalorder %s53, %s56
      %p62 = scmp.eq.s32.totalorder %s31, 0
      %p63 = por %p61, %p62
      %p64 = scmp.ne.s32.totalorder %s53, %s56
      %p65 = scmp.eq.s32.totalorder %s36, 2
      %p66 = por %p64, %p65
      %p67 = scmp.ne.s32.totalorder %s56, %s57
      %p68 = scmp.eq.s32.totalorder %s36, 0
      %p69 = por %p67, %p68
      %p70 = scmp.ne.s32.totalorder %s56, %s57
      %p71 = scmp.eq.s32.totalorder %s37, 2
      %p72 = por %p70, %p71
      %p74 = scmp.ne.s32.totalorder %s57, %s73
      %p75 = scmp.eq.s32.totalorder %s37, 0
      %p76 = por %p74, %p75
      %s77 = ssub.s32 %s39, %s46
      %p78 = scmp.eq.s32.totalorder %s77, 0
      %s80 = sadd.s32 %s79, 1
      %s81 = scalar_select %p78, %s79, %s80
      %p84 = pneg %p78
      %p85 = scmp.eq.s32.totalorder %s31, 2
      %p86 = por %p84, %p85
      %p87 = scmp.ne.s32.totalorder %s79, %s82
      %p88 = scmp.eq.s32.totalorder %s31, 0
      %p89 = por %p87, %p88
      %p90 = scmp.ne.s32.totalorder %s79, %s82
      %p91 = scmp.eq.s32.totalorder %s36, 2
      %p92 = por %p90, %p91
      %p93 = scmp.ne.s32.totalorder %s82, %s83
      %p94 = scmp.eq.s32.totalorder %s36, 0
      %p95 = por %p93, %p94
      %p96 = scmp.ne.s32.totalorder %s82, %s83
      %p97 = scmp.eq.s32.totalorder %s37, 2
      %p98 = por %p96, %p97
      %p100 = scmp.ne.s32.totalorder %s83, %s99
      %p101 = scmp.eq.s32.totalorder %s37, 0
      %p102 = por %p100, %p101
      %s103 = ssub.s32 %s38, %s50
      %p104 = scmp.eq.s32.totalorder %s103, 0
      %s106 = sadd.s32 %s105, 1
      %s107 = scalar_select %p104, %s105, %s106
      %p110 = pneg %p104
      %p111 = scmp.eq.s32.totalorder %s31, 2
      %p112 = por %p110, %p111
      %p113 = scmp.ne.s32.totalorder %s105, %s108
      %p114 = scmp.eq.s32.totalorder %s31, 0
      %p115 = por %p113, %p114
      %p116 = scmp.ne.s32.totalorder %s105, %s108
      %p117 = scmp.eq.s32.totalorder %s36, 2
      %p118 = por %p116, %p117
      %p119 = scmp.ne.s32.totalorder %s108, %s109
      %p120 = scmp.eq.s32.totalorder %s36, 0
      %p121 = por %p119, %p120
      %p122 = scmp.ne.s32.totalorder %s108, %s109
      %p123 = scmp.eq.s32.totalorder %s37, 2
      %p124 = por %p122, %p123
      %p126 = scmp.ne.s32.totalorder %s109, %s125
      %p127 = scmp.eq.s32.totalorder %s37, 0
      %p128 = por %p126, %p127
      %s130 = sadd.s32 %s129, 1
      %p133 = scmp.eq.s32.totalorder %s31, 2
      %p134 = scmp.ne.s32.totalorder %s129, %s131
      %p135 = scmp.eq.s32.totalorder %s31, 0
      %p136 = por %p134, %p135
      %p137 = scmp.ne.s32.totalorder %s129, %s131
      %p138 = scmp.eq.s32.totalorder %s36, 2
      %p139 = por %p137, %p138
      %p140 = scmp.ne.s32.totalorder %s131, %s132
      %p141 = scmp.eq.s32.totalorder %s36, 0
      %p142 = por %p140, %p141
      %p143 = scmp.ne.s32.totalorder %s131, %s132
      %p144 = scmp.eq.s32.totalorder %s37, 2
      %p145 = por %p143, %p144
      %p147 = scmp.ne.s32.totalorder %s132, %s146
      %p148 = scmp.eq.s32.totalorder %s37, 0
      %p149 = por %p147, %p148
      %s151 = sadd.s32 %s150, 1
      %p154 = scmp.eq.s32.totalorder %s31, 2
      %p155 = scmp.ne.s32.totalorder %s150, %s152
      %p156 = scmp.eq.s32.totalorder %s31, 0
      %p157 = por %p155, %p156
      %p158 = scmp.ne.s32.totalorder %s150, %s152
      %p159 = scmp.eq.s32.totalorder %s36, 2
      %p160 = por %p158, %p159
      %p161 = scmp.ne.s32.totalorder %s152, %s153
      %p162 = scmp.eq.s32.totalorder %s36, 0
      %p163 = por %p161, %p162
      %p164 = scmp.ne.s32.totalorder %s152, %s153
      %p165 = scmp.eq.s32.totalorder %s37, 2
      %p166 = por %p164, %p165
      %p168 = scmp.ne.s32.totalorder %s153, %s167
      %p169 = scmp.eq.s32.totalorder %s37, 0
      %p170 = por %p168, %p169
      %s172 = sadd.s32 %s171, 1
      %p175 = scmp.eq.s32.totalorder %s31, 2
      %p176 = scmp.ne.s32.totalorder %s171, %s173
      %p177 = scmp.eq.s32.totalorder %s31, 0
      %p178 = por %p176, %p177
      %p179 = scmp.ne.s32.totalorder %s171, %s173
      %p180 = scmp.eq.s32.totalorder %s36, 2
      %p181 = por %p179, %p180
      %p182 = scmp.ne.s32.totalorder %s173, %s174
      %p183 = scmp.eq.s32.totalorder %s36, 0
      %p184 = por %p182, %p183
      %p185 = scmp.ne.s32.totalorder %s173, %s174
      %p186 = scmp.eq.s32.totalorder %s37, 2
      %p187 = por %p185, %p186
      %p189 = scmp.ne.s32.totalorder %s174, %s188
      %p190 = scmp.eq.s32.totalorder %s37, 0
      %p191 = por %p189, %p190
      %s193 = sadd.s32 %s192, 1
      %p196 = scmp.eq.s32.totalorder %s31, 2
      %p197 = scmp.ne.s32.totalorder %s192, %s194
      %p198 = scmp.eq.s32.totalorder %s31, 0
      %p199 = por %p197, %p198
      %p200 = scmp.ne.s32.totalorder %s192, %s194
      %p201 = scmp.eq.s32.totalorder %s36, 2
      %p202 = por %p200, %p201
      %p203 = scmp.ne.s32.totalorder %s194, %s195
      %p204 = scmp.eq.s32.totalorder %s36, 0
      %p205 = por %p203, %p204
      %p206 = scmp.ne.s32.totalorder %s194, %s195
      %p207 = scmp.eq.s32.totalorder %s37, 2
      %p208 = por %p206, %p207
      %p210 = scmp.ne.s32.totalorder %s195, %s209
      %p211 = scmp.eq.s32.totalorder %s37, 0
      %p212 = por %p210, %p211
      %s214 = sadd.s32 %s213, 1
      %p217 = scmp.eq.s32.totalorder %s31, 2
      %p218 = scmp.ne.s32.totalorder %s213, %s215
      %p219 = scmp.eq.s32.totalorder %s31, 0
      %p220 = por %p218, %p219
      %p221 = scmp.ne.s32.totalorder %s213, %s215
      %p222 = scmp.eq.s32.totalorder %s36, 2
      %p223 = por %p221, %p222
      %p224 = scmp.ne.s32.totalorder %s215, %s216
      %p225 = scmp.eq.s32.totalorder %s36, 0
      %p226 = por %p224, %p225
      %p227 = scmp.ne.s32.totalorder %s215, %s216
      %p228 = scmp.eq.s32.totalorder %s37, 2
      %p229 = por %p227, %p228
      %p231 = scmp.ne.s32.totalorder %s216, %s230
      %p232 = scmp.eq.s32.totalorder %s37, 0
      %p233 = por %p231, %p232
      %s235 = sadd.s32 %s234, 1
      %p238 = scmp.eq.s32.totalorder %s31, 2
      %p239 = scmp.ne.s32.totalorder %s234, %s236
      %p240 = scmp.eq.s32.totalorder %s31, 0
      %p241 = por %p239, %p240
      %p242 = scmp.ne.s32.totalorder %s234, %s236
      %p243 = scmp.eq.s32.totalorder %s36, 2
      %p244 = por %p242, %p243
      %p245 = scmp.ne.s32.totalorder %s236, %s237
      %p246 = scmp.eq.s32.totalorder %s36, 0
      %p247 = por %p245, %p246
      %p248 = scmp.ne.s32.totalorder %s236, %s237
      %p249 = scmp.eq.s32.totalorder %s37, 2
      %p250 = por %p248, %p249
      %p252 = scmp.ne.s32.totalorder %s237, %s251
      %p253 = scmp.eq.s32.totalorder %s37, 0
      %p254 = por %p252, %p253
      %s255 = ssub.s32 %s39, %s46
      %s256 = ssub.s32 %s38, %s50
      %s257 = sor.u32 %s255, %s256
      %p258 = scmp.eq.s32.totalorder %s257, 0
      %s260 = sadd.s32 %s259, 1
      %s261 = scalar_select %p258, %s259, %s260
      %p264 = pneg %p258
      %p265 = scmp.eq.s32.totalorder %s31, 2
      %p266 = por %p264, %p265
      %p267 = scmp.ne.s32.totalorder %s259, %s262
      %p268 = scmp.eq.s32.totalorder %s31, 0
      %p269 = por %p267, %p268
      %p270 = scmp.ne.s32.totalorder %s259, %s262
      %p271 = scmp.eq.s32.totalorder %s36, 2
      %p272 = por %p270, %p271
      %p273 = scmp.ne.s32.totalorder %s262, %s263
      %p274 = scmp.eq.s32.totalorder %s36, 0
      %p275 = por %p273, %p274
      %p276 = scmp.ne.s32.totalorder %s262, %s263
      %p277 = scmp.eq.s32.totalorder %s37, 2
      %p278 = por %p276, %p277
      %p280 = scmp.ne.s32.totalorder %s263, %s279
      %p281 = scmp.eq.s32.totalorder %s37, 0
      %p282 = por %p280, %p281
      %s283 = ssub.s32 %s38, %s50
      %p284 = scmp.eq.s32.totalorder %s283, 0
      %s286 = sadd.s32 %s285, 1
      %s287 = scalar_select %p284, %s285, %s286
      %p290 = pneg %p284
      %p291 = scmp.eq.s32.totalorder %s31, 2
      %p292 = por %p290, %p291
      %p293 = scmp.ne.s32.totalorder %s285, %s288
      %p294 = scmp.eq.s32.totalorder %s31, 0
      %p295 = por %p293, %p294
      %p296 = scmp.ne.s32.totalorder %s285, %s288
      %p297 = scmp.eq.s32.totalorder %s36, 2
      %p298 = por %p296, %p297
      %p299 = scmp.ne.s32.totalorder %s288, %s289
      %p300 = scmp.eq.s32.totalorder %s36, 0
      %p301 = por %p299, %p300
      %p302 = scmp.ne.s32.totalorder %s288, %s289
      %p303 = scmp.eq.s32.totalorder %s37, 2
      %p304 = por %p302, %p303
      %p306 = scmp.ne.s32.totalorder %s289, %s305
      %p307 = scmp.eq.s32.totalorder %s37, 0
      %p308 = por %p306, %p307
      %s309 = ssub.s32 %s38, %s50
      %p310 = scmp.eq.s32.totalorder %s309, 0
      %s312 = sadd.s32 %s311, 1
      %s313 = scalar_select %p310, %s311, %s312
      %p316 = pneg %p310
      %p317 = scmp.eq.s32.totalorder %s31, 2
      %p318 = por %p316, %p317
      %p319 = scmp.ne.s32.totalorder %s311, %s314
      %p320 = scmp.eq.s32.totalorder %s31, 0
      %p321 = por %p319, %p320
      %p322 = scmp.ne.s32.totalorder %s311, %s314
      %p323 = scmp.eq.s32.totalorder %s36, 2
      %p324 = por %p322, %p323
      %p325 = scmp.ne.s32.totalorder %s314, %s315
      %p326 = scmp.eq.s32.totalorder %s36, 0
      %p327 = por %p325, %p326
      %p328 = scmp.ne.s32.totalorder %s314, %s315
      %p329 = scmp.eq.s32.totalorder %s37, 2
      %p330 = por %p328, %p329
      %p332 = scmp.ne.s32.totalorder %s315, %s331
      %p333 = scmp.eq.s32.totalorder %s37, 0
      %p334 = por %p332, %p333
      %p335 = scmp.le.s32.totalorder 1, %s31
      %p336 = scmp.lt.s32.totalorder %s31, 4
      %p337 = pnand %p335, %p336
      %p338 = pneg %p337
      // Predicated region
      $region9: #{tpu_custom_call.1} parent=5 // pred_check
        _
      $region10: #{tpu_custom_call.1} parent=5 // pred_check_branch
        %340 = sbr.rel (%p337) target = $region12
      $region11: #{tpu_custom_call.1} parent=5 // pred_region
        %s341 = ssub.s32 %s31, 1
        // Predicated region
        $region13: #{tpu_custom_call.1} parent=11 // pred_check
          %p342 = pneg %p121
        $region14: #{tpu_custom_call.1} parent=11 // pred_check_branch
          %344 = sbr.rel (%p342) target = $region16
        $region15: #{tpu_custom_call.1} parent=11 // pred_region
          %s345 = smul.u32 2, %s40
          %s347 = ssub.s32 256, 256
          %348 = vsyncadd [#allocation12], %s347
          %s349 = smul.addr %s345, 2
          %s350 = smul.addr %s349, 64
          %s351 = scalar_lea.hbm %s3, %s350
          %s352 = sshll.u32 [#allocation11], 4
          %s353 = int_to_ptr.vmem [resolvable:$true] %s352
          %358 = dma.hbm_to_vmem [thread:$0]  %s351, 256, %s353, [#allocation12], 64, 64, 4
        $region16: #{tpu_custom_call.1} parent=11 // pred_fallthru
          _
        // Predicated region
        $region17: #{tpu_custom_call.1} parent=11 // pred_check
          %p359 = pneg %p142
        $region18: #{tpu_custom_call.1} parent=11 // pred_check_branch
          %361 = sbr.rel (%p359) target = $region20
        $region19: #{tpu_custom_call.1} parent=11 // pred_region
          %s363 = ssub.s32 64, 64
          %364 = vsyncadd [#allocation12], %s363
          %s366 = sshll.u32 [#allocation13], 4
          %s367 = int_to_ptr.vmem [resolvable:$true] %s366
          %369 = dma.hbm_to_vmem [thread:$0]  %s4, 64, %s367, [#allocation12]
        $region20: #{tpu_custom_call.1} parent=11 // pred_fallthru
          _
        // Predicated region
        $region21: #{tpu_custom_call.1} parent=11 // pred_check
          %p370 = pneg %p163
        $region22: #{tpu_custom_call.1} parent=11 // pred_check_branch
          %372 = sbr.rel (%p370) target = $region24
        $region23: #{tpu_custom_call.1} parent=11 // pred_region
          _
        $region24: #{tpu_custom_call.1} parent=11 // pred_fallthru
          _
        // Predicated region
        $region25: #{tpu_custom_call.1} parent=11 // pred_check
          %p373 = pneg %p184
        $region26: #{tpu_custom_call.1} parent=11 // pred_check_branch
          %375 = sbr.rel (%p373) target = $region28
        $region27: #{tpu_custom_call.1} parent=11 // pred_region
          _
        $region28: #{tpu_custom_call.1} parent=11 // pred_fallthru
          _
        // Predicated region
        $region29: #{tpu_custom_call.1} parent=11 // pred_check
          %p376 = pneg %p205
        $region30: #{tpu_custom_call.1} parent=11 // pred_check_branch
          %378 = sbr.rel (%p376) target = $region32
        $region31: #{tpu_custom_call.1} parent=11 // pred_region
          _
        $region32: #{tpu_custom_call.1} parent=11 // pred_fallthru
          _
        // Predicated region
        $region33: #{tpu_custom_call.1} parent=11 // pred_check
          %p379 = pneg %p226
        $region34: #{tpu_custom_call.1} parent=11 // pred_check_branch
          %381 = sbr.rel (%p379) target = $region36
        $region35: #{tpu_custom_call.1} parent=11 // pred_region
          _
        $region36: #{tpu_custom_call.1} parent=11 // pred_fallthru
          _
        // Predicated region
        $region37: #{tpu_custom_call.1} parent=11 // pred_check
          %p382 = pneg %p247
        $region38: #{tpu_custom_call.1} parent=11 // pred_check_branch
          %384 = sbr.rel (%p382) target = $region40
        $region39: #{tpu_custom_call.1} parent=11 // pred_region
          _
        $region40: #{tpu_custom_call.1} parent=11 // pred_fallthru
          _
      $region12: #{tpu_custom_call.1} parent=5 // pred_fallthru
        _
      %p385 = scmp.lt.s32.totalorder %s31, 3
      // Predicated region
      $region41: #{tpu_custom_call.1} parent=5 // pred_check
        %p386 = pneg %p385
      $region42: #{tpu_custom_call.1} parent=5 // pred_check_branch
        %388 = sbr.rel (%p386) target = $region44
      $region43: #{tpu_custom_call.1} parent=5 // pred_region
        // Predicated region
        $region45: #{tpu_custom_call.1} parent=43 // pred_check
          %p389 = pneg %p63
        $region46: #{tpu_custom_call.1} parent=43 // pred_check_branch
          %391 = sbr.rel (%p389) target = $region48
        $region47: #{tpu_custom_call.1} parent=43 // pred_region
          %s392 = sand.u32 %s53, 1
          %s393 = scalar_lea.sflag [#allocation9], %s392
          %s394 = sand.u32 %s53, 1
          %s395 = smul.addr %s394, 4
          %s396 = scalar_lea.vmem [#allocation8], %s395
          %s398 = ssub.s32 64, 64
          %399 = vsyncadd %s393, %s398
          %s400 = smul.addr %s39, 64
          %s401 = scalar_lea.hbm %s1, %s400
          %s403 = sshll.u32 %s396, 4
          %s404 = int_to_ptr.vmem [resolvable:$true] %s403
          %406 = dma.hbm_to_vmem [thread:$0]  %s401, 64, %s404, %s393
        $region48: #{tpu_custom_call.1} parent=43 // pred_fallthru
          _
        // Predicated region
        $region49: #{tpu_custom_call.1} parent=43 // pred_check
          %p407 = pneg %p89
        $region50: #{tpu_custom_call.1} parent=43 // pred_check_branch
          %409 = sbr.rel (%p407) target = $region52
        $region51: #{tpu_custom_call.1} parent=43 // pred_region
          %p410 = scmp.lt.s32.totalorder %s39, 2
          %s411 = scalar_select %p410, %s39, 2
          %s412 = smul.addr %s411, 8
          %s413 = scalar_lea.vmem %s2, %s412
        $region52: #{tpu_custom_call.1} parent=43 // pred_fallthru
          _
      $region44: #{tpu_custom_call.1} parent=5 // pred_fallthru
        _
      %p414 = scmp.le.s32.totalorder 1, %s31
      %p415 = scmp.lt.s32.totalorder %s31, 4
      %p416 = pnand %p414, %p415
      %p417 = pneg %p416
      // Predicated region
      $region53: #{tpu_custom_call.1} parent=5 // pred_check
        _
      $region54: #{tpu_custom_call.1} parent=5 // pred_check_branch
        %419 = sbr.rel (%p416) target = $region56
      $region55: #{tpu_custom_call.1} parent=5 // pred_region
        %s420 = ssub.s32 %s31, 1
        %s421 = sand.u32 %s56, 1
        %s422 = scalar_lea.sflag [#allocation9], %s421
        %s423 = sand.u32 %s56, 1
        %s424 = smul.addr %s423, 4
        %s425 = scalar_lea.vmem [#allocation8], %s424
        // Predicated region
        $region57: #{tpu_custom_call.1} parent=55 // pred_check
          %p426 = pneg %p69
        $region58: #{tpu_custom_call.1} parent=55 // pred_check_branch
          %428 = sbr.rel (%p426) target = $region60
        $region59: #{tpu_custom_call.1} parent=55 // pred_region
          %429 = dma.done %s422, 64
        $region60: #{tpu_custom_call.1} parent=55 // pred_fallthru
          _
        // Predicated region
        $region61: #{tpu_custom_call.1} parent=55 // pred_check
          %p430 = pneg %p121
        $region62: #{tpu_custom_call.1} parent=55 // pred_check_branch
          %432 = sbr.rel (%p430) target = $region64
        $region63: #{tpu_custom_call.1} parent=55 // pred_region
          %433 = dma.done [#allocation12], 256
        $region64: #{tpu_custom_call.1} parent=55 // pred_fallthru
          _
        // Predicated region
        $region65: #{tpu_custom_call.1} parent=55 // pred_check
          %p434 = pneg %p142
        $region66: #{tpu_custom_call.1} parent=55 // pred_check_branch
          %436 = sbr.rel (%p434) target = $region68
        $region67: #{tpu_custom_call.1} parent=55 // pred_region
          %437 = dma.done [#allocation12], 64
        $region68: #{tpu_custom_call.1} parent=55 // pred_fallthru
          _
        %s438 = sand.u32 %s56, 1
        %s439 = scalar_lea.sflag [#allocation9], %s438
        %s440 = sand.u32 %s56, 1
        %s441 = smul.addr %s440, 4
        %s442 = scalar_lea.vmem [#allocation8], %s441
        %p443 = pneg %p69
        %p444 = pneg %p66
        %p445 = scmp.lt.s32.totalorder %s41, 2
        %s446 = scalar_select %p445, %s41, 2
        %s447 = smul.addr %s446, 8
        %s448 = scalar_lea.vmem %s2, %s447
        %p449 = pneg %p95
        %p450 = pneg %p92
        %p451 = pneg %p121
        %p452 = pneg %p118
        %p453 = pneg %p142
        %p454 = pneg %p139
        %p455 = pneg %p163
        %p456 = pneg %p160
        %p457 = pneg %p184
        %p458 = pneg %p181
        %p459 = pneg %p205
        %p460 = pneg %p202
        %p461 = pneg %p226
        %p462 = pneg %p223
        %p463 = pneg %p247
        %p464 = pneg %p244
        %p465 = pneg %p275
        %p466 = pneg %p272
        %p467 = scmp.lt.s32.totalorder %s41, 2
        %s468 = scalar_select %p467, %s41, 2
        %p469 = scmp.lt.s32.totalorder %s40, 0
        %s470 = scalar_select %p469, %s40, 0
        %s471 = smul.addr %s470, 2
        %s472 = smul.addr %s468, 2
        %s473 = sadd.s32 %s471, %s472
        %s474 = scalar_lea.vmem %s10, %s473
        %p475 = pneg %p301
        %p476 = pneg %p298
        %p477 = pneg %p327
        %p478 = pneg %p324
        %p479 = scmp.lt.s32.totalorder %s41, 2
        %s480 = scalar_select %p479, %s41, 2
        %s481 = smul.addr %s480, 8
        %s482 = scalar_lea.vmem %s2, %s481
        %s483 = smul.u32 2, %s40
        %p484 = scmp.lt.s32.totalorder %s41, 2
        %s485 = scalar_select %p484, %s41, 2
        %p486 = scmp.lt.s32.totalorder %s40, 0
        %s487 = scalar_select %p486, %s40, 0
        %s488 = smul.addr %s487, 2
        %s489 = smul.addr %s485, 2
        %s490 = sadd.s32 %s488, %s489
        %s491 = scalar_lea.vmem %s10, %s490
        %s493 = sld [smem:[#allocation7 + %s41]]
        %s494 = scvt.s32.f32 %s493
        %v495 = vld [vmem:[%s482] sm:$0xff]
        %v496 = vld [vmem:[#allocation11] sm:$0xf]
        %v497 = vld [vmem:[#allocation11 + $0x4] sm:$0xf]
        %v498 = vld [vmem:[#allocation11 + $0x8] sm:$0xf]
        %v499 = vld [vmem:[#allocation11 + $0xc] sm:$0xf]
        %v500 = vlaneseq
        %v501 = vshrl.u32 %v500, 7
        %v502 = vlaneseq
        %v503 = vand.u32 %v502, 127
        %v504 = vstv %s493
        %vm505 = vcmp.lt.s32.totalorder %v501, %v504
        %v506 = vsel %vm505, 1, 0
        %v507 = vcvt.s32.f32 %v506
        %vm508 = vcmp.lt.s32.totalorder %v503, %v504
        %v509 = vld [vmem:[%s425] sm:$0xf]
        %v510 = vunpack.c.l.bf16 %v509
        %v511 = vmul.f32 %v510, %v507
        %v512 = vpack.c.bf16 %v511, %v511
        %vm513 = vcmask 261120
        %v515 = vsel %vm513, %v512, 0
        %517 = vmatprep.subr.bf16.mxu0 0
        %518 = vmatpush1.bf16.xpose.msra.mxu0 0
        %519 = vmatprep.subr.bf16.mxu0 0
        %520 = vmatpush1.bf16.xpose.msra.mxu0 0
        %521 = vmatprep.subr.bf16.mxu0 0
        %522 = vmatpush1.bf16.xpose.msra.mxu0 0
        %523 = vmatprep.subr.bf16.mxu0 0
        %524 = vmatpush1.bf16.xpose.msra.mxu0 0
        %525 = vmatprep.subr.bf16.mxu0 0
        %526 = vmatpush1.bf16.xpose.msra.mxu0 0
        %527 = vmatprep.subr.bf16.mxu0 0
        %528 = vmatpush1.bf16.xpose.msra.mxu0 0
        %529 = vmatprep.subr.bf16.mxu0 0
        %530 = vmatpush1.bf16.xpose.msra.mxu0 0
        %531 = vmatprep.subr.bf16.mxu0 0
        %532 = vmatpush1.bf16.xpose.msra.mxu0 %v515
        %533 = vmatprep.subr.bf16.mxu0 0
        %534 = vmatpush2.bf16.xpose.msra.mxu0 0
        %535 = vmatprep.subr.bf16.mxu0 0
        %536 = vmatpush2.bf16.xpose.msra.mxu0 0
        %537 = vmatprep.subr.bf16.mxu0 0
        %538 = vmatpush2.bf16.xpose.msra.mxu0 0
        %539 = vmatprep.subr.bf16.mxu0 0
        %540 = vmatpush2.bf16.xpose.msra.mxu0 0
        %541 = vmatprep.subr.bf16.mxu0 0
        %542 = vmatpush2.bf16.xpose.msra.mxu0 0
        %543 = vmatprep.subr.bf16.mxu0 0
        %544 = vmatpush2.bf16.xpose.msra.mxu0 0
        %545 = vmatprep.subr.bf16.mxu0 0
        %546 = vmatpush2.bf16.xpose.msra.mxu0 0
        %547 = vmatprep.subr.bf16.mxu0 0
        %548 = vmatpush2.bf16.xpose.msra.mxu0 0
        %549 = vmatprep.mubr.bf16.mxu0 0
        %550 = vmatmul.mubr.bf16.gmra.mxu0 %v515
        %v551 = vpop.f32.mrf.mxu0
        %v552 = vadd.f32 0.0, %v551
        %v553 = vpop.f32.mrf.mxu0
        %v554 = vpop.f32.mrf.mxu0
        %v555 = vpop.f32.mrf.mxu0
        %556 = vdwg.mxu0
        %v557 = vmul.f32 %v552, 4.0
        %v558 = vsel %vm508, 1, 0
        %vm559 = vcmp.eq.s32.totalorder %v558, 1
        %v560 = vsel %vm559, %v557, -1e+30
        %vm561 = vcmask 64512
        %v562 = vsel %vm561, %v560, -inf
        %563 = vmax.xlane.f32.xlu0 %v562
        %v564 = vpop.xlane.xlu0 %563
        %v565 = vsub.f32 %v560, %v564
        %v566 = vmul.f32 %v565, 1.442695
        %v567 = vpow.pop %v566
        %v568 = vsel %vm561, %v567, 0.0
        %569 = vadd.xlane.f32.xlu0 %v568
        %v570 = vpop.xlane.xlu0 %569
        %v571 = vrcp.pop %v570
        %v572 = vmul.f32 %v567, %v571
        %v573 = vmul.f32 %v495, %v572
        %v574 = vmul.f32 %v573, %v573
        %v575 = vsel %vm561, %v574, 0.0
        %576 = vadd.xlane.f32.xlu0 %v575
        %v577 = vpop.xlane.xlu0 %576
        %v578 = vrsqrt.pop %v577
        %v579 = vmul.f32 %v577, %v578
        %vm580 = vcmp.eq.f32.partialorder %v577, inf
        %v581 = vsel %vm580, %v577, %v579
        %vm582 = vcmp.eq.f32.partialorder %v577, 0.0
        %v583 = vand.u32 %v577, 2147483648
        %v584 = vsel %vm582, %v583, %v581
        %v585 = vadd.f32 %v584, 1e-08
        %v586 = vrcp.pop %v585
        %v587 = vmul.f32 %v573, %v586
        %v588 = vmul.f32 %v587, %v495
        %v589 = vsel %vm561, %v588, 0.0
        %590 = vadd.xlane.f32.xlu0 %v589
        %v591 = vpop.xlane.xlu0 %590
        %v594 = vunpack.c.l.b16 %v496
        %v595 = vunpack.c.l.b16 %v497
        %v596 = vpack.c.b16 %v595, %v594
        %v598 = vsel %vm513, %v596, 0
        %600 = vmatprep.subr.bf16.mxu0 0
        %601 = vmatpush1.bf16.xpose.msra.mxu0 0
        %602 = vmatprep.subr.bf16.mxu0 0
        %603 = vmatpush1.bf16.xpose.msra.mxu0 0
        %604 = vmatprep.subr.bf16.mxu0 0
        %605 = vmatpush1.bf16.xpose.msra.mxu0 0
        %606 = vmatprep.subr.bf16.mxu0 0
        %607 = vmatpush1.bf16.xpose.msra.mxu0 0
        %608 = vmatprep.subr.bf16.mxu0 0
        %609 = vmatpush1.bf16.xpose.msra.mxu0 0
        %610 = vmatprep.subr.bf16.mxu0 0
        %611 = vmatpush1.bf16.xpose.msra.mxu0 0
        %612 = vmatprep.subr.bf16.mxu0 0
        %613 = vmatpush1.bf16.xpose.msra.mxu0 0
        %614 = vmatprep.subr.bf16.mxu0 0
        %615 = vmatpush1.bf16.xpose.msra.mxu0 %v598
        %616 = vmatprep.subr.bf16.mxu0 0
        %617 = vmatpush2.bf16.xpose.msra.mxu0 0
        %618 = vmatprep.subr.bf16.mxu0 0
        %619 = vmatpush2.bf16.xpose.msra.mxu0 0
        %620 = vmatprep.subr.bf16.mxu0 0
        %621 = vmatpush2.bf16.xpose.msra.mxu0 0
        %622 = vmatprep.subr.bf16.mxu0 0
        %623 = vmatpush2.bf16.xpose.msra.mxu0 0
        %624 = vmatprep.subr.bf16.mxu0 0
        %625 = vmatpush2.bf16.xpose.msra.mxu0 0
        %626 = vmatprep.subr.bf16.mxu0 0
        %627 = vmatpush2.bf16.xpose.msra.mxu0 0
        %628 = vmatprep.subr.bf16.mxu0 0
        %629 = vmatpush2.bf16.xpose.msra.mxu0 0
        %630 = vmatprep.subr.bf16.mxu0 0
        %631 = vmatpush2.bf16.xpose.msra.mxu0 0
        %632 = vmatprep.mubr.bf16.mxu0 0
        %633 = vmatmul.mubr.bf16.gmra.mxu0 %v515
        %v634 = vpop.f32.mrf.mxu0
        %v635 = vadd.f32 0.0, %v634
        %v636 = vpop.f32.mrf.mxu0
        %v637 = vpop.f32.mrf.mxu0
        %v638 = vpop.f32.mrf.mxu0
        %639 = vdwg.mxu0
        %v642 = vunpack.c.l.b16 %v498
        %v643 = vunpack.c.l.b16 %v499
        %v644 = vpack.c.b16 %v643, %v642
        %v646 = vsel %vm513, %v644, 0
        %648 = vmatprep.subr.bf16.mxu0 0
        %649 = vmatpush1.bf16.xpose.msra.mxu0 0
        %650 = vmatprep.subr.bf16.mxu0 0
        %651 = vmatpush1.bf16.xpose.msra.mxu0 0
        %652 = vmatprep.subr.bf16.mxu0 0
        %653 = vmatpush1.bf16.xpose.msra.mxu0 0
        %654 = vmatprep.subr.bf16.mxu0 0
        %655 = vmatpush1.bf16.xpose.msra.mxu0 0
        %656 = vmatprep.subr.bf16.mxu0 0
        %657 = vmatpush1.bf16.xpose.msra.mxu0 0
        %658 = vmatprep.subr.bf16.mxu0 0
        %659 = vmatpush1.bf16.xpose.msra.mxu0 0
        %660 = vmatprep.subr.bf16.mxu0 0
        %661 = vmatpush1.bf16.xpose.msra.mxu0 0
        %662 = vmatprep.subr.bf16.mxu0 0
        %663 = vmatpush1.bf16.xpose.msra.mxu0 %v646
        %664 = vmatprep.subr.bf16.mxu0 0
        %665 = vmatpush2.bf16.xpose.msra.mxu0 0
        %666 = vmatprep.subr.bf16.mxu0 0
        %667 = vmatpush2.bf16.xpose.msra.mxu0 0
        %668 = vmatprep.subr.bf16.mxu0 0
        %669 = vmatpush2.bf16.xpose.msra.mxu0 0
        %670 = vmatprep.subr.bf16.mxu0 0
        %671 = vmatpush2.bf16.xpose.msra.mxu0 0
        %672 = vmatprep.subr.bf16.mxu0 0
        %673 = vmatpush2.bf16.xpose.msra.mxu0 0
        %674 = vmatprep.subr.bf16.mxu0 0
        %675 = vmatpush2.bf16.xpose.msra.mxu0 0
        %676 = vmatprep.subr.bf16.mxu0 0
        %677 = vmatpush2.bf16.xpose.msra.mxu0 0
        %678 = vmatprep.subr.bf16.mxu0 0
        %679 = vmatpush2.bf16.xpose.msra.mxu0 0
        %680 = vmatprep.mubr.bf16.mxu0 0
        %681 = vmatmul.mubr.bf16.gmra.mxu0 %v515
        %v682 = vpop.f32.mrf.mxu0
        %v683 = vadd.f32 0.0, %v682
        %v684 = vpop.f32.mrf.mxu0
        %v685 = vpop.f32.mrf.mxu0
        %v686 = vpop.f32.mrf.mxu0
        %687 = vdwg.mxu0
        %vm688 = vcmp.ge.f32.partialorder %v635, 0.0
        %vm689 = vcmp.ge.f32.partialorder %v683, 0.0
        %v690 = vmul.f32 %v635, 0.1
        %v691 = vmul.f32 %v683, 0.1
        %v692 = vsel %vm688, %v635, %v690
        %v693 = vsel %vm689, %v683, %v691
        %v694 = vmul.f32 %v692, %v692
        %v695 = vmul.f32 %v693, %v693
        %vm696 = vcmask 130048
        %v697 = vsel %vm696, %v694, 0.0
        %v698 = vrot.slane %v697, 4
        %v699 = vadd.f32 %v697, %v698
        %v700 = vrot.slane %v699, 2
        %v701 = vadd.f32 %v699, %v700
        %v702 = vrot.slane %v701, 1
        %v703 = vadd.f32 %v701, %v702
        %v704 = vsel %vm696, %v695, 0.0
        %v705 = vrot.slane %v704, 4
        %v706 = vadd.f32 %v704, %v705
        %v707 = vrot.slane %v706, 2
        %v708 = vadd.f32 %v706, %v707
        %v709 = vrot.slane %v708, 1
        %v710 = vadd.f32 %v708, %v709
        %v711 = vrsqrt.pop %v703
        %v712 = vmul.f32 %v703, %v711
        %vm713 = vcmp.eq.f32.partialorder %v703, inf
        %v714 = vsel %vm713, %v703, %v712
        %vm715 = vcmp.eq.f32.partialorder %v703, 0.0
        %v716 = vand.u32 %v703, 2147483648
        %v717 = vsel %vm715, %v716, %v714
        %v718 = vrsqrt.pop %v710
        %v719 = vmul.f32 %v710, %v718
        %vm720 = vcmp.eq.f32.partialorder %v710, inf
        %v721 = vsel %vm720, %v710, %v719
        %vm722 = vcmp.eq.f32.partialorder %v710, 0.0
        %v723 = vand.u32 %v710, 2147483648
        %v724 = vsel %vm722, %v723, %v721
        %v725 = vadd.f32 %v717, 1e-08
        %v726 = vadd.f32 %v724, 1e-08
        %v727 = vrcp.pop %v725
        %v728 = vmul.f32 %v692, %v727
        %v729 = vrcp.pop %v726
        %v730 = vmul.f32 %v693, %v729
        %v731 = vmul.f32 %v728, 4.0
        %v732 = vmul.f32 %v730, 4.0
        %v733 = vsel %vm696, %v731, -inf
        %734 = vmax.xlane.f32.xlu0 %v733
        %v735 = vpop.xlane.xlu0 %734
        %v736 = vsel %vm696, %v732, -inf
        %737 = vmax.xlane.f32.xlu0 %v736
        %v738 = vpop.xlane.xlu0 %737
        %v739 = vsub.f32 %v731, %v735
        %v740 = vsub.f32 %v732, %v738
        %v741 = vmul.f32 %v739, 1.442695
        %v742 = vpow.pop %v741
        %v743 = vmul.f32 %v740, 1.442695
        %v744 = vpow.pop %v743
        %v745 = vsel %vm696, %v742, 0.0
        %746 = vadd.xlane.f32.xlu0 %v745
        %v747 = vpop.xlane.xlu0 %746
        %v748 = vsel %vm696, %v744, 0.0
        %749 = vadd.xlane.f32.xlu0 %v748
        %v750 = vpop.xlane.xlu0 %749
        %v751 = vrcp.pop %v747
        %v752 = vrcp.pop %v750
        %v753 = vmul.f32 %v742, %v751
        %v754 = vmul.f32 %v744, %v752
        %v755 = vpack.c.bf16 %v753, %v753
        %v756 = vpack.c.bf16 %v754, %v754
        %v759 = vsel %vm696, %v755, 0
        %761 = vmatprep.subr.bf16.mxu0 0
        %762 = vmatpush1.bf16.msra.mxu0 0
        %763 = vmatprep.subr.bf16.mxu0 0
        %764 = vmatpush1.bf16.msra.mxu0 0
        %765 = vmatprep.subr.bf16.mxu0 0
        %766 = vmatpush1.bf16.msra.mxu0 0
        %767 = vmatprep.subr.bf16.mxu0 0
        %768 = vmatpush1.bf16.msra.mxu0 0
        %769 = vmatprep.subr.bf16.mxu0 0
        %770 = vmatpush1.bf16.msra.mxu0 0
        %771 = vmatprep.subr.bf16.mxu0 0
        %772 = vmatpush1.bf16.msra.mxu0 0
        %773 = vmatprep.subr.bf16.mxu0 0
        %774 = vmatpush1.bf16.msra.mxu0 0
        %775 = vmatprep.subr.bf16.mxu0 0
        %776 = vmatpush1.bf16.msra.mxu0 %v596
        %777 = vmatprep.subr.bf16.mxu0 0
        %778 = vmatpush2.bf16.msra.mxu0 0
        %779 = vmatprep.subr.bf16.mxu0 0
        %780 = vmatpush2.bf16.msra.mxu0 0
        %781 = vmatprep.subr.bf16.mxu0 0
        %782 = vmatpush2.bf16.msra.mxu0 0
        %783 = vmatprep.subr.bf16.mxu0 0
        %784 = vmatpush2.bf16.msra.mxu0 0
        %785 = vmatprep.subr.bf16.mxu0 0
        %786 = vmatpush2.bf16.msra.mxu0 0
        %787 = vmatprep.subr.bf16.mxu0 0
        %788 = vmatpush2.bf16.msra.mxu0 0
        %789 = vmatprep.subr.bf16.mxu0 0
        %790 = vmatpush2.bf16.msra.mxu0 0
        %791 = vmatprep.subr.bf16.mxu0 0
        %792 = vmatpush2.bf16.msra.mxu0 0
        %793 = vmatprep.mubr.bf16.mxu0 0
        %794 = vmatmul.mubr.bf16.gmra.mxu0 %v759
        %v795 = vpop.f32.mrf.mxu0
        %v796 = vadd.f32 0.0, %v795
        %v797 = vpop.f32.mrf.mxu0
        %v798 = vpop.f32.mrf.mxu0
        %v799 = vpop.f32.mrf.mxu0
        %800 = vdwg.mxu0
        %v803 = vsel %vm696, %v756, 0
        %805 = vmatprep.subr.bf16.mxu0 0
        %806 = vmatpush1.bf16.msra.mxu0 0
        %807 = vmatprep.subr.bf16.mxu0 0
        %808 = vmatpush1.bf16.msra.mxu0 0
        %809 = vmatprep.subr.bf16.mxu0 0
        %810 = vmatpush1.bf16.msra.mxu0 0
        %811 = vmatprep.subr.bf16.mxu0 0
        %812 = vmatpush1.bf16.msra.mxu0 0
        %813 = vmatprep.subr.bf16.mxu0 0
        %814 = vmatpush1.bf16.msra.mxu0 0
        %815 = vmatprep.subr.bf16.mxu0 0
        %816 = vmatpush1.bf16.msra.mxu0 0
        %817 = vmatprep.subr.bf16.mxu0 0
        %818 = vmatpush1.bf16.msra.mxu0 0
        %819 = vmatprep.subr.bf16.mxu0 0
        %820 = vmatpush1.bf16.msra.mxu0 %v644
        %821 = vmatprep.subr.bf16.mxu0 0
        %822 = vmatpush2.bf16.msra.mxu0 0
        %823 = vmatprep.subr.bf16.mxu0 0
        %824 = vmatpush2.bf16.msra.mxu0 0
        %825 = vmatprep.subr.bf16.mxu0 0
        %826 = vmatpush2.bf16.msra.mxu0 0
        %827 = vmatprep.subr.bf16.mxu0 0
        %828 = vmatpush2.bf16.msra.mxu0 0
        %829 = vmatprep.subr.bf16.mxu0 0
        %830 = vmatpush2.bf16.msra.mxu0 0
        %831 = vmatprep.subr.bf16.mxu0 0
        %832 = vmatpush2.bf16.msra.mxu0 0
        %833 = vmatprep.subr.bf16.mxu0 0
        %834 = vmatpush2.bf16.msra.mxu0 0
        %835 = vmatprep.subr.bf16.mxu0 0
        %836 = vmatpush2.bf16.msra.mxu0 0
        %837 = vmatprep.mubr.bf16.mxu0 0
        %838 = vmatmul.mubr.bf16.gmra.mxu0 %v803
        %v839 = vpop.f32.mrf.mxu0
        %v840 = vadd.f32 0.0, %v839
        %v841 = vpop.f32.mrf.mxu0
        %v842 = vpop.f32.mrf.mxu0
        %v843 = vpop.f32.mrf.mxu0
        %844 = vdwg.mxu0
        %v845 = vadd.s32 %v501, 8
        %v846 = vadd.s32 %v501, 16
        %v847 = vadd.s32 %v501, 24
        %v848 = vmul.u32 %v503, 8
        %vm849 = vcmp.ge.s32.totalorder %v501, %v848
        %vm850 = vcmp.ge.s32.totalorder %v845, %v848
        %vm851 = vcmp.ge.s32.totalorder %v846, %v848
        %vm852 = vcmp.ge.s32.totalorder %v847, %v848
        %v853 = vadd.s32 %v503, 1
        %v854 = vmul.u32 %v853, 8
        %vm855 = vcmp.lt.s32.totalorder %v501, %v854
        %vm856 = vcmp.lt.s32.totalorder %v845, %v854
        %vm857 = vcmp.lt.s32.totalorder %v846, %v854
        %vm858 = vcmp.lt.s32.totalorder %v847, %v854
        %vm859 = vmand %vm849, %vm855
        %vm860 = vmand %vm850, %vm856
        %vm861 = vmand %vm851, %vm857
        %vm862 = vmand %vm852, %vm858
        %v863 = vsel %vm859, 1, 0
        %v864 = vsel %vm860, 1, 0
        %v865 = vsel %vm861, 1, 0
        %v866 = vsel %vm862, 1, 0
        %v867 = vcvt.s32.f32 %v863
        %v868 = vcvt.s32.f32 %v864
        %v869 = vcvt.s32.f32 %v865
        %v870 = vcvt.s32.f32 %v866
        %v871 = vmul.f32 %v511, %v796
        %v872 = vmul.f32 %v511, %v840
        %v874 = vsel %vm513, %v871, 0
        %v877 = vsel %vm513, %v872, 0
        %879 = vmatprep.subr.mxu0 0.0
        %880 = vmatpush1.msra.mxu0 0.0
        %881 = vmatprep.subr.mxu0 0.0
        %882 = vmatpush1.msra.mxu0 0.0
        %883 = vmatprep.subr.mxu0 0.0
        %884 = vmatpush1.msra.mxu0 0.0
        %885 = vmatprep.subr.mxu0 0.0
        %886 = vmatpush1.msra.mxu0 0.0
        %887 = vmatprep.subr.mxu0 0.0
        %888 = vmatpush1.msra.mxu0 0.0
        %889 = vmatprep.subr.mxu0 0.0
        %890 = vmatpush1.msra.mxu0 0.0
        %891 = vmatprep.subr.mxu0 0.0
        %892 = vmatpush1.msra.mxu0 0.0
        %893 = vmatprep.subr.mxu0 0.0
        %894 = vmatpush1.msra.mxu0 0.0
        %895 = vmatprep.subr.mxu0 0.0
        %896 = vmatpush1.msra.mxu0 0.0
        %897 = vmatprep.subr.mxu0 0.0
        %898 = vmatpush1.msra.mxu0 0.0
        %899 = vmatprep.subr.mxu0 0.0
        %900 = vmatpush1.msra.mxu0 0.0
        %901 = vmatprep.subr.mxu0 0.0
        %902 = vmatpush1.msra.mxu0 0.0
        %903 = vmatprep.subr.mxu0 0.0
        %904 = vmatpush1.msra.mxu0 %v870
        %905 = vmatprep.subr.mxu0 0.0
        %906 = vmatpush1.msra.mxu0 %v869
        %907 = vmatprep.subr.mxu0 0.0
        %908 = vmatpush1.msra.mxu0 %v868
        %909 = vmatprep.subr.mxu0 0.0
        %910 = vmatpush1.msra.mxu0 %v867
        %911 = vmatprep.subr.mxu0 0.0
        %912 = vmatpush2.msra.mxu0 0.0
        %913 = vmatprep.subr.mxu0 0.0
        %914 = vmatpush2.msra.mxu0 0.0
        %915 = vmatprep.subr.mxu0 0.0
        %916 = vmatpush2.msra.mxu0 0.0
        %917 = vmatprep.subr.mxu0 0.0
        %918 = vmatpush2.msra.mxu0 0.0
        %919 = vmatprep.subr.mxu0 0.0
        %920 = vmatpush2.msra.mxu0 0.0
        %921 = vmatprep.subr.mxu0 0.0
        %922 = vmatpush2.msra.mxu0 0.0
        %923 = vmatprep.subr.mxu0 0.0
        %924 = vmatpush2.msra.mxu0 0.0
        %925 = vmatprep.subr.mxu0 0.0
        %926 = vmatpush2.msra.mxu0 0.0
        %927 = vmatprep.subr.mxu0 0.0
        %928 = vmatpush2.msra.mxu0 0.0
        %929 = vmatprep.subr.mxu0 0.0
        %930 = vmatpush2.msra.mxu0 0.0
        %931 = vmatprep.subr.mxu0 0.0
        %932 = vmatpush2.msra.mxu0 0.0
        %933 = vmatprep.subr.mxu0 0.0
        %934 = vmatpush2.msra.mxu0 0.0
        %935 = vmatprep.subr.mxu0 0.0
        %936 = vmatpush2.msra.mxu0 0.0
        %937 = vmatprep.subr.mxu0 0.0
        %938 = vmatpush2.msra.mxu0 0.0
        %939 = vmatprep.subr.mxu0 0.0
        %940 = vmatpush2.msra.mxu0 0.0
        %941 = vmatprep.subr.mxu0 0.0
        %942 = vmatpush2.msra.mxu0 0.0
        %943 = vmatprep.mubr.f32.mxu0 0.0
        %944 = vmatmul.mubr.f32.gmra.mxu0 %v874
        %v945 = vpop.f32.mrf.mxu0
        %v946 = vadd.f32 0.0, %v945
        %v947 = vpop.f32.mrf.mxu0
        %948 = vmatprep.mubr.f32.mxu0 0.0
        %949 = vmatmul.mubr.f32.gmra.mxu0 %v877
        %v950 = vpop.f32.mrf.mxu0
        %v951 = vadd.f32 0.0, %v950
        %v952 = vpop.f32.mrf.mxu0
        %953 = vdwg.mxu0
        %v954 = vmul.f32 %v511, %v511
        %v956 = vsel %vm513, %v954, 0
        %958 = vmatprep.subr.mxu0 0.0
        %959 = vmatpush1.msra.mxu0 0.0
        %960 = vmatprep.subr.mxu0 0.0
        %961 = vmatpush1.msra.mxu0 0.0
        %962 = vmatprep.subr.mxu0 0.0
        %963 = vmatpush1.msra.mxu0 0.0
        %964 = vmatprep.subr.mxu0 0.0
        %965 = vmatpush1.msra.mxu0 0.0
        %966 = vmatprep.subr.mxu0 0.0
        %967 = vmatpush1.msra.mxu0 0.0
        %968 = vmatprep.subr.mxu0 0.0
        %969 = vmatpush1.msra.mxu0 0.0
        %970 = vmatprep.subr.mxu0 0.0
        %971 = vmatpush1.msra.mxu0 0.0
        %972 = vmatprep.subr.mxu0 0.0
        %973 = vmatpush1.msra.mxu0 0.0
        %974 = vmatprep.subr.mxu0 0.0
        %975 = vmatpush1.msra.mxu0 0.0
        %976 = vmatprep.subr.mxu0 0.0
        %977 = vmatpush1.msra.mxu0 0.0
        %978 = vmatprep.subr.mxu0 0.0
        %979 = vmatpush1.msra.mxu0 0.0
        %980 = vmatprep.subr.mxu0 0.0
        %981 = vmatpush1.msra.mxu0 0.0
        %982 = vmatprep.subr.mxu0 0.0
        %983 = vmatpush1.msra.mxu0 %v870
        %984 = vmatprep.subr.mxu0 0.0
        %985 = vmatpush1.msra.mxu0 %v869
        %986 = vmatprep.subr.mxu0 0.0
        %987 = vmatpush1.msra.mxu0 %v868
        %988 = vmatprep.subr.mxu0 0.0
        %989 = vmatpush1.msra.mxu0 %v867
        %990 = vmatprep.subr.mxu0 0.0
        %991 = vmatpush2.msra.mxu0 0.0
        %992 = vmatprep.subr.mxu0 0.0
        %993 = vmatpush2.msra.mxu0 0.0
        %994 = vmatprep.subr.mxu0 0.0
        %995 = vmatpush2.msra.mxu0 0.0
        %996 = vmatprep.subr.mxu0 0.0
        %997 = vmatpush2.msra.mxu0 0.0
        %998 = vmatprep.subr.mxu0 0.0
        %999 = vmatpush2.msra.mxu0 0.0
        %1000 = vmatprep.subr.mxu0 0.0
        %1001 = vmatpush2.msra.mxu0 0.0
        %1002 = vmatprep.subr.mxu0 0.0
        %1003 = vmatpush2.msra.mxu0 0.0
        %1004 = vmatprep.subr.mxu0 0.0
        %1005 = vmatpush2.msra.mxu0 0.0
        %1006 = vmatprep.subr.mxu0 0.0
        %1007 = vmatpush2.msra.mxu0 0.0
        %1008 = vmatprep.subr.mxu0 0.0
        %1009 = vmatpush2.msra.mxu0 0.0
        %1010 = vmatprep.subr.mxu0 0.0
        %1011 = vmatpush2.msra.mxu0 0.0
        %1012 = vmatprep.subr.mxu0 0.0
        %1013 = vmatpush2.msra.mxu0 0.0
        %1014 = vmatprep.subr.mxu0 0.0
        %1015 = vmatpush2.msra.mxu0 0.0
        %1016 = vmatprep.subr.mxu0 0.0
        %1017 = vmatpush2.msra.mxu0 0.0
        %1018 = vmatprep.subr.mxu0 0.0
        %1019 = vmatpush2.msra.mxu0 0.0
        %1020 = vmatprep.subr.mxu0 0.0
        %1021 = vmatpush2.msra.mxu0 0.0
        %1022 = vmatprep.mubr.f32.mxu0 0.0
        %1023 = vmatmul.mubr.f32.gmra.mxu0 %v956
        %v1024 = vpop.f32.mrf.mxu0
        %v1025 = vadd.f32 0.0, %v1024
        %v1026 = vpop.f32.mrf.mxu0
        %1027 = vmatprep.mubr.f32.mxu0 0.0
        %1028 = vmatmul.mubr.f32.gmra.mxu0 %v956
        %v1029 = vpop.f32.mrf.mxu0
        %v1030 = vadd.f32 0.0, %v1029
        %v1031 = vpop.f32.mrf.mxu0
        %1032 = vdwg.mxu0
        %v1033 = vmul.f32 %v796, %v796
        %v1034 = vmul.f32 %v840, %v840
        %v1036 = vsel %vm513, %v1033, 0
        %v1039 = vsel %vm513, %v1034, 0
        %1041 = vmatprep.subr.mxu0 0.0
        %1042 = vmatpush1.msra.mxu0 0.0
        %1043 = vmatprep.subr.mxu0 0.0
        %1044 = vmatpush1.msra.mxu0 0.0
        %1045 = vmatprep.subr.mxu0 0.0
        %1046 = vmatpush1.msra.mxu0 0.0
        %1047 = vmatprep.subr.mxu0 0.0
        %1048 = vmatpush1.msra.mxu0 0.0
        %1049 = vmatprep.subr.mxu0 0.0
        %1050 = vmatpush1.msra.mxu0 0.0
        %1051 = vmatprep.subr.mxu0 0.0
        %1052 = vmatpush1.msra.mxu0 0.0
        %1053 = vmatprep.subr.mxu0 0.0
        %1054 = vmatpush1.msra.mxu0 0.0
        %1055 = vmatprep.subr.mxu0 0.0
        %1056 = vmatpush1.msra.mxu0 0.0
        %1057 = vmatprep.subr.mxu0 0.0
        %1058 = vmatpush1.msra.mxu0 0.0
        %1059 = vmatprep.subr.mxu0 0.0
        %1060 = vmatpush1.msra.mxu0 0.0
        %1061 = vmatprep.subr.mxu0 0.0
        %1062 = vmatpush1.msra.mxu0 0.0
        %1063 = vmatprep.subr.mxu0 0.0
        %1064 = vmatpush1.msra.mxu0 0.0
        %1065 = vmatprep.subr.mxu0 0.0
        %1066 = vmatpush1.msra.mxu0 %v870
        %1067 = vmatprep.subr.mxu0 0.0
        %1068 = vmatpush1.msra.mxu0 %v869
        %1069 = vmatprep.subr.mxu0 0.0
        %1070 = vmatpush1.msra.mxu0 %v868
        %1071 = vmatprep.subr.mxu0 0.0
        %1072 = vmatpush1.msra.mxu0 %v867
        %1073 = vmatprep.subr.mxu0 0.0
        %1074 = vmatpush2.msra.mxu0 0.0
        %1075 = vmatprep.subr.mxu0 0.0
        %1076 = vmatpush2.msra.mxu0 0.0
        %1077 = vmatprep.subr.mxu0 0.0
        %1078 = vmatpush2.msra.mxu0 0.0
        %1079 = vmatprep.subr.mxu0 0.0
        %1080 = vmatpush2.msra.mxu0 0.0
        %1081 = vmatprep.subr.mxu0 0.0
        %1082 = vmatpush2.msra.mxu0 0.0
        %1083 = vmatprep.subr.mxu0 0.0
        %1084 = vmatpush2.msra.mxu0 0.0
        %1085 = vmatprep.subr.mxu0 0.0
        %1086 = vmatpush2.msra.mxu0 0.0
        %1087 = vmatprep.subr.mxu0 0.0
        %1088 = vmatpush2.msra.mxu0 0.0
        %1089 = vmatprep.subr.mxu0 0.0
        %1090 = vmatpush2.msra.mxu0 0.0
        %1091 = vmatprep.subr.mxu0 0.0
        %1092 = vmatpush2.msra.mxu0 0.0
        %1093 = vmatprep.subr.mxu0 0.0
        %1094 = vmatpush2.msra.mxu0 0.0
        %1095 = vmatprep.subr.mxu0 0.0
        %1096 = vmatpush2.msra.mxu0 0.0
        %1097 = vmatprep.subr.mxu0 0.0
        %1098 = vmatpush2.msra.mxu0 0.0
        %1099 = vmatprep.subr.mxu0 0.0
        %1100 = vmatpush2.msra.mxu0 0.0
        %1101 = vmatprep.subr.mxu0 0.0
        %1102 = vmatpush2.msra.mxu0 0.0
        %1103 = vmatprep.subr.mxu0 0.0
        %1104 = vmatpush2.msra.mxu0 0.0
        %1105 = vmatprep.mubr.f32.mxu0 0.0
        %1106 = vmatmul.mubr.f32.gmra.mxu0 %v1036
        %v1107 = vpop.f32.mrf.mxu0
        %v1108 = vadd.f32 0.0, %v1107
        %v1109 = vpop.f32.mrf.mxu0
        %1110 = vmatprep.mubr.f32.mxu0 0.0
        %1111 = vmatmul.mubr.f32.gmra.mxu0 %v1039
        %v1112 = vpop.f32.mrf.mxu0
        %v1113 = vadd.f32 0.0, %v1112
        %v1114 = vpop.f32.mrf.mxu0
        %1115 = vdwg.mxu0
        %v1116 = vmul.f32 %v1025, %v1108
        %v1117 = vmul.f32 %v1030, %v1113
        %v1118 = vrsqrt.pop %v1116
        %v1119 = vmul.f32 %v1116, %v1118
        %vm1120 = vcmp.eq.f32.partialorder %v1116, inf
        %v1121 = vsel %vm1120, %v1116, %v1119
        %vm1122 = vcmp.eq.f32.partialorder %v1116, 0.0
        %v1123 = vand.u32 %v1116, 2147483648
        %v1124 = vsel %vm1122, %v1123, %v1121
        %v1125 = vrsqrt.pop %v1117
        %v1126 = vmul.f32 %v1117, %v1125
        %vm1127 = vcmp.eq.f32.partialorder %v1117, inf
        %v1128 = vsel %vm1127, %v1117, %v1126
        %vm1129 = vcmp.eq.f32.partialorder %v1117, 0.0
        %v1130 = vand.u32 %v1117, 2147483648
        %v1131 = vsel %vm1129, %v1130, %v1128
        %v1132 = vmax.f32 %v1124, 1e-08
        %v1133 = vmax.f32 %v1131, 1e-08
        %v1134 = vrcp.pop %v1132
        %v1135 = vmul.f32 %v946, %v1134
        %v1136 = vrcp.pop %v1133
        %v1137 = vmul.f32 %v951, %v1136
        %v1138 = vmul.f32 %v1135, %v591
        %v1139 = vmul.f32 %v1137, %v591
        %v1140 = vld [vmem:[#allocation13] sm:$0xf]
        %v1141 = vld [vmem:[%s5] sm:$0x1]
        %v1143 = vlaneseq
        %v1144 = vshrl.u32 %v1143, 7
        %v1145 = vsub.s32 0, %v1144
        %v1146 = vrot.slane %v1141, %v1145
        %vm1148 = vcmask 31744
        %v1150 = vsel %vm1148, %v1138, 0
        %v1153 = vsel %vm1148, %v1139, 0
        %vm1155 = vcmask 1043456
        %v1157 = vsel %vm1155, %v1140, 0
        %1159 = vmatprep.subr.mxu0 0.0
        %1160 = vmatpush1.msra.mxu0 0.0
        %1161 = vmatprep.subr.mxu0 0.0
        %1162 = vmatpush1.msra.mxu0 0.0
        %1163 = vmatprep.subr.mxu0 0.0
        %1164 = vmatpush1.msra.mxu0 0.0
        %1165 = vmatprep.subr.mxu0 0.0
        %1166 = vmatpush1.msra.mxu0 0.0
        %1167 = vmatprep.subr.mxu0 0.0
        %1168 = vmatpush1.msra.mxu0 0.0
        %1169 = vmatprep.subr.mxu0 0.0
        %1170 = vmatpush1.msra.mxu0 0.0
        %1171 = vmatprep.subr.mxu0 0.0
        %1172 = vmatpush1.msra.mxu0 0.0
        %1173 = vmatprep.subr.mxu0 0.0
        %1174 = vmatpush1.msra.mxu0 0.0
        %1175 = vmatprep.subr.mxu0 0.0
        %1176 = vmatpush1.msra.mxu0 0.0
        %1177 = vmatprep.subr.mxu0 0.0
        %1178 = vmatpush1.msra.mxu0 0.0
        %1179 = vmatprep.subr.mxu0 0.0
        %1180 = vmatpush1.msra.mxu0 0.0
        %1181 = vmatprep.subr.mxu0 0.0
        %1182 = vmatpush1.msra.mxu0 0.0
        %1183 = vmatprep.subr.mxu0 0.0
        %1184 = vmatpush1.msra.mxu0 0.0
        %1185 = vmatprep.subr.mxu0 0.0
        %1186 = vmatpush1.msra.mxu0 0.0
        %1187 = vmatprep.subr.mxu0 0.0
        %1188 = vmatpush1.msra.mxu0 0.0
        %1189 = vmatprep.subr.mxu0 0.0
        %1190 = vmatpush1.msra.mxu0 %v1157
        %1191 = vmatprep.subr.mxu0 0.0
        %1192 = vmatpush2.msra.mxu0 0.0
        %1193 = vmatprep.subr.mxu0 0.0
        %1194 = vmatpush2.msra.mxu0 0.0
        %1195 = vmatprep.subr.mxu0 0.0
        %1196 = vmatpush2.msra.mxu0 0.0
        %1197 = vmatprep.subr.mxu0 0.0
        %1198 = vmatpush2.msra.mxu0 0.0
        %1199 = vmatprep.subr.mxu0 0.0
        %1200 = vmatpush2.msra.mxu0 0.0
        %1201 = vmatprep.subr.mxu0 0.0
        %1202 = vmatpush2.msra.mxu0 0.0
        %1203 = vmatprep.subr.mxu0 0.0
        %1204 = vmatpush2.msra.mxu0 0.0
        %1205 = vmatprep.subr.mxu0 0.0
        %1206 = vmatpush2.msra.mxu0 0.0
        %1207 = vmatprep.subr.mxu0 0.0
        %1208 = vmatpush2.msra.mxu0 0.0
        %1209 = vmatprep.subr.mxu0 0.0
        %1210 = vmatpush2.msra.mxu0 0.0
        %1211 = vmatprep.subr.mxu0 0.0
        %1212 = vmatpush2.msra.mxu0 0.0
        %1213 = vmatprep.subr.mxu0 0.0
        %1214 = vmatpush2.msra.mxu0 0.0
        %1215 = vmatprep.subr.mxu0 0.0
        %1216 = vmatpush2.msra.mxu0 0.0
        %1217 = vmatprep.subr.mxu0 0.0
        %1218 = vmatpush2.msra.mxu0 0.0
        %1219 = vmatprep.subr.mxu0 0.0
        %1220 = vmatpush2.msra.mxu0 0.0
        %1221 = vmatprep.subr.mxu0 0.0
        %1222 = vmatpush2.msra.mxu0 0.0
        %1223 = vmatprep.mubr.f32.mxu0 0.0
        %1224 = vmatmul.mubr.f32.gmra.mxu0 %v1150
        %v1225 = vpop.f32.mrf.mxu0
        %v1226 = vadd.f32 %v1146, %v1225
        %v1227 = vpop.f32.mrf.mxu0
        %1228 = vmatprep.mubr.f32.mxu0 0.0
        %1229 = vmatmul.mubr.f32.gmra.mxu0 %v1153
        %v1230 = vpop.f32.mrf.mxu0
        %v1231 = vadd.f32 %v1146, %v1230
        %v1232 = vpop.f32.mrf.mxu0
        %1233 = vdwg.mxu0
        %v1234 = vmax.f32 %v1226, 0.0
        %v1235 = vmax.f32 %v1231, 0.0
        %v1236 = vld [vmem:[%s6] sm:$0xff]
        %v1237 = vld [vmem:[%s6 + $0x8] sm:$0xff]
        %v1238 = vld [vmem:[%s6 + $0x10] sm:$0xff]
        %v1239 = vld [vmem:[%s6 + $0x18] sm:$0xff]
        %v1240 = vld [vmem:[%s7] sm:$0x1]
        %v1242 = vlaneseq
        %v1243 = vshrl.u32 %v1242, 7
        %v1244 = vsub.s32 0, %v1243
        %v1245 = vrot.slane %v1240, %v1244
        %v1248 = vsel %vm513, %v1234, 0
        %v1251 = vsel %vm513, %v1235, 0
        %1253 = vmatprep.subr.mxu0 0.0
        %1254 = vmatpush1.msra.mxu0 0.0
        %1255 = vmatprep.subr.mxu0 0.0
        %1256 = vmatpush1.msra.mxu0 0.0
        %1257 = vmatprep.subr.mxu0 0.0
        %1258 = vmatpush1.msra.mxu0 0.0
        %1259 = vmatprep.subr.mxu0 0.0
        %1260 = vmatpush1.msra.mxu0 0.0
        %1261 = vmatprep.subr.mxu0 0.0
        %1262 = vmatpush1.msra.mxu0 0.0
        %1263 = vmatprep.subr.mxu0 0.0
        %1264 = vmatpush1.msra.mxu0 0.0
        %1265 = vmatprep.subr.mxu0 0.0
        %1266 = vmatpush1.msra.mxu0 0.0
        %1267 = vmatprep.subr.mxu0 0.0
        %1268 = vmatpush1.msra.mxu0 0.0
        %1269 = vmatprep.subr.mxu0 0.0
        %1270 = vmatpush1.msra.mxu0 0.0
        %1271 = vmatprep.subr.mxu0 0.0
        %1272 = vmatpush1.msra.mxu0 0.0
        %1273 = vmatprep.subr.mxu0 0.0
        %1274 = vmatpush1.msra.mxu0 0.0
        %1275 = vmatprep.subr.mxu0 0.0
        %1276 = vmatpush1.msra.mxu0 0.0
        %1277 = vmatprep.subr.mxu0 0.0
        %1278 = vmatpush1.msra.mxu0 %v1239
        %1279 = vmatprep.subr.mxu0 0.0
        %1280 = vmatpush1.msra.mxu0 %v1238
        %1281 = vmatprep.subr.mxu0 0.0
        %1282 = vmatpush1.msra.mxu0 %v1237
        %1283 = vmatprep.subr.mxu0 0.0
        %1284 = vmatpush1.msra.mxu0 %v1236
        %1285 = vmatprep.subr.mxu0 0.0
        %1286 = vmatpush2.msra.mxu0 0.0
        %1287 = vmatprep.subr.mxu0 0.0
        %1288 = vmatpush2.msra.mxu0 0.0
        %1289 = vmatprep.subr.mxu0 0.0
        %1290 = vmatpush2.msra.mxu0 0.0
        %1291 = vmatprep.subr.mxu0 0.0
        %1292 = vmatpush2.msra.mxu0 0.0
        %1293 = vmatprep.subr.mxu0 0.0
        %1294 = vmatpush2.msra.mxu0 0.0
        %1295 = vmatprep.subr.mxu0 0.0
        %1296 = vmatpush2.msra.mxu0 0.0
        %1297 = vmatprep.subr.mxu0 0.0
        %1298 = vmatpush2.msra.mxu0 0.0
        %1299 = vmatprep.subr.mxu0 0.0
        %1300 = vmatpush2.msra.mxu0 0.0
        %1301 = vmatprep.subr.mxu0 0.0
        %1302 = vmatpush2.msra.mxu0 0.0
        %1303 = vmatprep.subr.mxu0 0.0
        %1304 = vmatpush2.msra.mxu0 0.0
        %1305 = vmatprep.subr.mxu0 0.0
        %1306 = vmatpush2.msra.mxu0 0.0
        %1307 = vmatprep.subr.mxu0 0.0
        %1308 = vmatpush2.msra.mxu0 0.0
        %1309 = vmatprep.subr.mxu0 0.0
        %1310 = vmatpush2.msra.mxu0 0.0
        %1311 = vmatprep.subr.mxu0 0.0
        %1312 = vmatpush2.msra.mxu0 0.0
        %1313 = vmatprep.subr.mxu0 0.0
        %1314 = vmatpush2.msra.mxu0 0.0
        %1315 = vmatprep.subr.mxu0 0.0
        %1316 = vmatpush2.msra.mxu0 0.0
        %1317 = vmatprep.mubr.f32.mxu0 0.0
        %1318 = vmatmul.mubr.f32.gmra.mxu0 %v1248
        %v1319 = vpop.f32.mrf.mxu0
        %v1320 = vadd.f32 %v1245, %v1319
        %v1321 = vpop.f32.mrf.mxu0
        %1322 = vmatprep.mubr.f32.mxu0 0.0
        %1323 = vmatmul.mubr.f32.gmra.mxu0 %v1251
        %v1324 = vpop.f32.mrf.mxu0
        %v1325 = vadd.f32 %v1245, %v1324
        %v1326 = vpop.f32.mrf.mxu0
        %1327 = vdwg.mxu0
        %v1328 = vmul.f32 %v1320, 0.5
        %v1329 = vmul.f32 %v1325, 0.5
        %v1330 = vmul.f32 %v1328, 1.442695
        %v1331 = vpow.pop %v1330
        %v1332 = vmul.f32 %v1329, 1.442695
        %v1333 = vpow.pop %v1332
        %v1334 = vtanh.pop %v1320
        %v1335 = vtanh.pop %v1325
        %v1336 = vld [vmem:[%s8] sm:$0xff]
        %v1337 = vld [vmem:[%s8 + $0x8] sm:$0xff]
        %v1338 = vld [vmem:[%s8 + $0x10] sm:$0xff]
        %v1339 = vld [vmem:[%s8 + $0x18] sm:$0xff]
        %v1340 = vld [vmem:[%s9] sm:$0x1]
        %v1342 = vlaneseq
        %v1343 = vshrl.u32 %v1342, 7
        %v1344 = vsub.s32 0, %v1343
        %v1345 = vrot.slane %v1340, %v1344
        %1349 = vrot.lane.b32.xlu0 %v1334, 64
        %v1350 = vpop.permute.xlu0 %1349
        %1351 = vrot.lane.b32.xlu0 %v1335, 64
        %v1352 = vpop.permute.xlu0 %1351
        %v1353 = vsel %vm513, %v1350, 0
        %v1355 = vsel %vm513, %v1352, 0
        %1357 = vmatprep.subr.mxu0 0.0
        %1358 = vmatpush1.msra.mxu0 0.0
        %1359 = vmatprep.subr.mxu0 0.0
        %1360 = vmatpush1.msra.mxu0 0.0
        %1361 = vmatprep.subr.mxu0 0.0
        %1362 = vmatpush1.msra.mxu0 0.0
        %1363 = vmatprep.subr.mxu0 0.0
        %1364 = vmatpush1.msra.mxu0 0.0
        %1365 = vmatprep.subr.mxu0 0.0
        %1366 = vmatpush1.msra.mxu0 0.0
        %1367 = vmatprep.subr.mxu0 0.0
        %1368 = vmatpush1.msra.mxu0 0.0
        %1369 = vmatprep.subr.mxu0 0.0
        %1370 = vmatpush1.msra.mxu0 0.0
        %1371 = vmatprep.subr.mxu0 0.0
        %1372 = vmatpush1.msra.mxu0 0.0
        %1373 = vmatprep.subr.mxu0 0.0
        %1374 = vmatpush1.msra.mxu0 0.0
        %1375 = vmatprep.subr.mxu0 0.0
        %1376 = vmatpush1.msra.mxu0 0.0
        %1377 = vmatprep.subr.mxu0 0.0
        %1378 = vmatpush1.msra.mxu0 0.0
        %1379 = vmatprep.subr.mxu0 0.0
        %1380 = vmatpush1.msra.mxu0 0.0
        %1381 = vmatprep.subr.mxu0 0.0
        %1382 = vmatpush1.msra.mxu0 %v1339
        %1383 = vmatprep.subr.mxu0 0.0
        %1384 = vmatpush1.msra.mxu0 %v1338
        %1385 = vmatprep.subr.mxu0 0.0
        %1386 = vmatpush1.msra.mxu0 %v1337
        %1387 = vmatprep.subr.mxu0 0.0
        %1388 = vmatpush1.msra.mxu0 %v1336
        %1389 = vmatprep.subr.mxu0 0.0
        %1390 = vmatpush2.msra.mxu0 0.0
        %1391 = vmatprep.subr.mxu0 0.0
        %1392 = vmatpush2.msra.mxu0 0.0
        %1393 = vmatprep.subr.mxu0 0.0
        %1394 = vmatpush2.msra.mxu0 0.0
        %1395 = vmatprep.subr.mxu0 0.0
        %1396 = vmatpush2.msra.mxu0 0.0
        %1397 = vmatprep.subr.mxu0 0.0
        %1398 = vmatpush2.msra.mxu0 0.0
        %1399 = vmatprep.subr.mxu0 0.0
        %1400 = vmatpush2.msra.mxu0 0.0
        %1401 = vmatprep.subr.mxu0 0.0
        %1402 = vmatpush2.msra.mxu0 0.0
        %1403 = vmatprep.subr.mxu0 0.0
        %1404 = vmatpush2.msra.mxu0 0.0
        %1405 = vmatprep.subr.mxu0 0.0
        %1406 = vmatpush2.msra.mxu0 0.0
        %1407 = vmatprep.subr.mxu0 0.0
        %1408 = vmatpush2.msra.mxu0 0.0
        %1409 = vmatprep.subr.mxu0 0.0
        %1410 = vmatpush2.msra.mxu0 0.0
        %1411 = vmatprep.subr.mxu0 0.0
        %1412 = vmatpush2.msra.mxu0 0.0
        %1413 = vmatprep.subr.mxu0 0.0
        %1414 = vmatpush2.msra.mxu0 0.0
        %1415 = vmatprep.subr.mxu0 0.0
        %1416 = vmatpush2.msra.mxu0 0.0
        %1417 = vmatprep.subr.mxu0 0.0
        %1418 = vmatpush2.msra.mxu0 0.0
        %1419 = vmatprep.subr.mxu0 0.0
        %1420 = vmatpush2.msra.mxu0 0.0
        %1421 = vmatprep.mubr.f32.mxu0 0.0
        %1422 = vmatmul.mubr.f32.gmra.mxu0 %v1353
        %v1423 = vpop.f32.mrf.mxu0
        %v1424 = vadd.f32 %v1345, %v1423
        %v1425 = vpop.f32.mrf.mxu0
        %1426 = vmatprep.mubr.f32.mxu0 0.0
        %1427 = vmatmul.mubr.f32.gmra.mxu0 %v1355
        %v1428 = vpop.f32.mrf.mxu0
        %v1429 = vadd.f32 %v1345, %v1428
        %v1430 = vpop.f32.mrf.mxu0
        %1431 = vdwg.mxu0
        %v1432 = vmul.f32 %v1424, %v507
        %v1433 = vmul.f32 %v1429, %v507
        %v1434 = vsel %vm696, %v1432, 0.0
        %1435 = vadd.xlane.f32.xlu0 %v1434
        %v1436 = vpop.xlane.xlu0 %1435
        %v1437 = vsel %vm696, %v1433, 0.0
        %1438 = vadd.xlane.f32.xlu0 %v1437
        %v1439 = vpop.xlane.xlu0 %1438
        %v1440 = vrot.slane %v1436, 4
        %v1441 = vadd.f32 %v1436, %v1440
        %v1442 = vrot.slane %v1441, 2
        %v1443 = vadd.f32 %v1441, %v1442
        %v1444 = vrot.slane %v1443, 1
        %v1445 = vadd.f32 %v1443, %v1444
        %v1446 = vrot.slane %v1439, 4
        %v1447 = vadd.f32 %v1439, %v1446
        %v1448 = vrot.slane %v1447, 2
        %v1449 = vadd.f32 %v1447, %v1448
        %v1450 = vrot.slane %v1449, 1
        %v1451 = vadd.f32 %v1449, %v1450
        %s1452 = smul.f32 %s494, 16.0
        %v1453 = vstv %s1452
        %v1454 = vrcp.pop %v1453
        %v1455 = vmul.f32 %v1445, %v1454
        %v1456 = vmul.f32 %v1451, %v1454
        %vm1457 = vcmask 0
        %1458 = vst.msk [vmem:[%s491] sm:$0x1] %vm1457, %v1455
        %1459 = vst.msk [vmem:[%s491 + $0x1] sm:$0x1] %vm1457, %v1456
        %v1460 = vmul.f32 %v1320, %v507
        %v1461 = vmul.f32 %v1325, %v507
        %v1462 = vmul.f32 %v1331, %v507
        %v1463 = vmul.f32 %v1333, %v507
        %p1464 = scmp.eq.s32.totalorder %s41, 0
        // Predicated region
        $region69: #{tpu_custom_call.1} parent=55 // pred_check
          %p1465 = pneg %p1464
        $region70: #{tpu_custom_call.1} parent=55 // pred_check_branch
          %1467 = sbr.rel (%p1465) target = $region72
        $region71: #{tpu_custom_call.1} parent=55 // pred_region
          %1468 = vst.msk [vmem:[#allocation4] sm:$0x1] %vm1457, -1e+30
          %1469 = vst.msk [vmem:[#allocation4 + $0x1] sm:$0x1] %vm1457, -1e+30
          %1470 = vst.msk [vmem:[#allocation5] sm:$0x1] %vm1457, 0.0
          %1471 = vst.msk [vmem:[#allocation5 + $0x1] sm:$0x1] %vm1457, 0.0
          %1472 = vst.msk [vmem:[#allocation2] sm:$0xff] %vm513, 0.0
          %1473 = vst.msk [vmem:[#allocation2 + $0x8] sm:$0xff] %vm513, 0.0
          %1474 = vst.msk [vmem:[#allocation3] sm:$0xff] %vm513, 0.0
          %1475 = vst.msk [vmem:[#allocation3 + $0x8] sm:$0xff] %vm513, 0.0
        $region72: #{tpu_custom_call.1} parent=55 // pred_fallthru
          _
        %v1476 = vld [vmem:[#allocation4] sm:$0x1]
        %v1477 = vld [vmem:[#allocation4 + $0x1] sm:$0x1]
        %v1478 = vmax.f32 %v1476, %v1455
        %v1479 = vmax.f32 %v1477, %v1456
        %v1480 = vsub.f32 %v1476, %v1478
        %v1481 = vsub.f32 %v1477, %v1479
        %v1482 = vmul.f32 %v1480, 1.442695
        %v1483 = vpow.pop %v1482
        %v1484 = vmul.f32 %v1481, 1.442695
        %v1485 = vpow.pop %v1484
        %v1486 = vsub.f32 %v1455, %v1478
        %v1487 = vsub.f32 %v1456, %v1479
        %v1488 = vmul.f32 %v1486, 1.442695
        %v1489 = vpow.pop %v1488
        %v1490 = vmul.f32 %v1487, 1.442695
        %v1491 = vpow.pop %v1490
        %v1492 = vld [vmem:[#allocation5] sm:$0x1]
        %v1493 = vld [vmem:[#allocation5 + $0x1] sm:$0x1]
        %v1494 = vmul.f32 %v1483, %v1492
        %v1495 = vmul.f32 %v1485, %v1493
        %v1496 = vadd.f32 %v1494, %v1489
        %v1497 = vadd.f32 %v1495, %v1491
        %1498 = vst.msk [vmem:[#allocation5] sm:$0x1] %vm1457, %v1496
        %1499 = vst.msk [vmem:[#allocation5 + $0x1] sm:$0x1] %vm1457, %v1497
        %v1500 = vld [vmem:[#allocation2] sm:$0xff]
        %v1501 = vld [vmem:[#allocation2 + $0x8] sm:$0xff]
        %v1504 = vlaneseq
        %v1505 = vshrl.u32 %v1504, 7
        %v1506 = vsub.s32 0, %v1505
        %v1507 = vrot.slane %v1483, %v1506
        %v1508 = vlaneseq
        %v1509 = vshrl.u32 %v1508, 7
        %v1510 = vsub.s32 0, %v1509
        %v1511 = vrot.slane %v1485, %v1510
        %1512 = vset.pattern.permute.xlu0 0
        %1513 = vperm.xlu0 %1512, %v1507
        %v1514 = vpop.permute.xlu0 %1513
        %1516 = vset.pattern.permute.xlu0 0
        %1517 = vperm.xlu0 %1516, %v1511
        %v1518 = vpop.permute.xlu0 %1517
        %v1520 = vmul.f32 %v1514, %v1500
        %v1521 = vmul.f32 %v1518, %v1501
        %v1524 = vlaneseq
        %v1525 = vshrl.u32 %v1524, 7
        %v1526 = vsub.s32 0, %v1525
        %v1527 = vrot.slane %v1489, %v1526
        %v1528 = vlaneseq
        %v1529 = vshrl.u32 %v1528, 7
        %v1530 = vsub.s32 0, %v1529
        %v1531 = vrot.slane %v1491, %v1530
        %1532 = vset.pattern.permute.xlu0 0
        %1533 = vperm.xlu0 %1532, %v1527
        %v1534 = vpop.permute.xlu0 %1533
        %1536 = vset.pattern.permute.xlu0 0
        %1537 = vperm.xlu0 %1536, %v1531
        %v1538 = vpop.permute.xlu0 %1537
        %v1540 = vmul.f32 %v1534, %v1460
        %v1541 = vmul.f32 %v1538, %v1461
        %v1542 = vadd.f32 %v1520, %v1540
        %v1543 = vadd.f32 %v1521, %v1541
        %1544 = vst.msk [vmem:[#allocation2] sm:$0xff] %vm513, %v1542
        %1545 = vst.msk [vmem:[#allocation2 + $0x8] sm:$0xff] %vm513, %v1543
        %v1546 = vld [vmem:[#allocation3] sm:$0xff]
        %v1547 = vld [vmem:[#allocation3 + $0x8] sm:$0xff]
        %v1548 = vmul.f32 %v1514, %v1546
        %v1549 = vmul.f32 %v1518, %v1547
        %v1550 = vmul.f32 %v1462, %v1462
        %v1551 = vmul.f32 %v1463, %v1463
        %v1552 = vmul.f32 %v1460, %v1460
        %v1553 = vmul.f32 %v1461, %v1461
        %1556 = vrot.lane.b32.xlu0 %v1552, 32
        %v1557 = vpop.permute.xlu0 %1556
        %1558 = vrot.lane.b32.xlu0 %v1553, 32
        %v1559 = vpop.permute.xlu0 %1558
        %v1562 = vadd.f32 %v1550, %v1557
        %v1563 = vadd.f32 %v1551, %v1559
        %v1564 = vmul.f32 %v1534, %v1562
        %v1565 = vmul.f32 %v1538, %v1563
        %1568 = vrot.lane.b32.xlu0 %v1564, 96
        %v1569 = vpop.permute.xlu0 %1568
        %1570 = vrot.lane.b32.xlu0 %v1565, 96
        %v1571 = vpop.permute.xlu0 %1570
        %v1574 = vadd.f32 %v1548, %v1569
        %v1575 = vadd.f32 %v1549, %v1571
        %1576 = vst.msk [vmem:[#allocation3] sm:$0xff] %vm513, %v1574
        %1577 = vst.msk [vmem:[#allocation3 + $0x8] sm:$0xff] %vm513, %v1575
        %1578 = vst.msk [vmem:[#allocation4] sm:$0x1] %vm1457, %v1478
        %1579 = vst.msk [vmem:[#allocation4 + $0x1] sm:$0x1] %vm1457, %v1479
        %p1580 = scmp.eq.s32.totalorder %s41, 2
        // Predicated region
        $region73: #{tpu_custom_call.1} parent=55 // pred_check
          %p1581 = pneg %p1580
        $region74: #{tpu_custom_call.1} parent=55 // pred_check_branch
          %1583 = sbr.rel (%p1581) target = $region76
        $region75: #{tpu_custom_call.1} parent=55 // pred_region
          %v1584 = vld [vmem:[#allocation5] sm:$0x1]
          %v1585 = vld [vmem:[#allocation5 + $0x1] sm:$0x1]
          %v1586 = vrcp.pop %v1584
          %v1587 = vmul.f32 1.0, %v1586
          %v1588 = vrcp.pop %v1585
          %v1589 = vmul.f32 1.0, %v1588
          %v1590 = vld [vmem:[#allocation2] sm:$0xff]
          %v1591 = vld [vmem:[#allocation2 + $0x8] sm:$0xff]
          %v1594 = vlaneseq
          %v1595 = vshrl.u32 %v1594, 7
          %v1596 = vsub.s32 0, %v1595
          %v1597 = vrot.slane %v1587, %v1596
          %v1598 = vlaneseq
          %v1599 = vshrl.u32 %v1598, 7
          %v1600 = vsub.s32 0, %v1599
          %v1601 = vrot.slane %v1589, %v1600
          %1602 = vset.pattern.permute.xlu0 0
          %1603 = vperm.xlu0 %1602, %v1597
          %v1604 = vpop.permute.xlu0 %1603
          %1606 = vset.pattern.permute.xlu0 0
          %1607 = vperm.xlu0 %1606, %v1601
          %v1608 = vpop.permute.xlu0 %1607
          %v1610 = vmul.f32 %v1590, %v1604
          %v1611 = vmul.f32 %v1591, %v1608
          %v1612 = vld [vmem:[#allocation3] sm:$0xff]
          %v1613 = vld [vmem:[#allocation3 + $0x8] sm:$0xff]
          %v1614 = vmul.f32 %v1612, %v1604
          %v1615 = vmul.f32 %v1613, %v1608
          %v1616 = vmul.f32 %v1610, %v1610
          %v1617 = vmul.f32 %v1611, %v1611
          %v1618 = vsub.f32 %v1614, %v1616
          %v1619 = vsub.f32 %v1615, %v1617
          %1620 = vst.msk [vmem:[#allocation14] sm:$0xff] %vm513, %v1610
          %1621 = vst.msk [vmem:[#allocation14 + $0x8] sm:$0xff] %vm513, %v1611
          %v1622 = vmax.f32 %v1618, 1e-08
          %v1623 = vmax.f32 %v1619, 1e-08
          %v1624 = vrsqrt.pop %v1622
          %v1625 = vmul.f32 %v1622, %v1624
          %vm1626 = vcmp.eq.f32.partialorder %v1622, inf
          %v1627 = vsel %vm1626, %v1622, %v1625
          %vm1628 = vcmp.eq.f32.partialorder %v1622, 0.0
          %v1629 = vand.u32 %v1622, 2147483648
          %v1630 = vsel %vm1628, %v1629, %v1627
          %v1631 = vrsqrt.pop %v1623
          %v1632 = vmul.f32 %v1623, %v1631
          %vm1633 = vcmp.eq.f32.partialorder %v1623, inf
          %v1634 = vsel %vm1633, %v1623, %v1632
          %vm1635 = vcmp.eq.f32.partialorder %v1623, 0.0
          %v1636 = vand.u32 %v1623, 2147483648
          %v1637 = vsel %vm1635, %v1636, %v1634
          %1638 = vst.msk [vmem:[#allocation15] sm:$0xff] %vm513, %v1630
          %1639 = vst.msk [vmem:[#allocation15 + $0x8] sm:$0xff] %vm513, %v1637
        $region76: #{tpu_custom_call.1} parent=55 // pred_fallthru
          _
        %p1640 = scmp.lt.s32.totalorder %s41, 2
        %s1641 = scalar_select %p1640, %s41, 2
        %p1642 = scmp.lt.s32.totalorder %s40, 0
        %s1643 = scalar_select %p1642, %s40, 0
        %s1644 = smul.addr %s1643, 2
        %s1645 = smul.addr %s1641, 2
        %s1646 = sadd.s32 %s1644, %s1645
        %s1647 = scalar_lea.vmem %s10, %s1646
        // Predicated region
        $region77: #{tpu_custom_call.1} parent=55 // pred_check
          %p1648 = pneg %p272
        $region78: #{tpu_custom_call.1} parent=55 // pred_check_branch
          %1650 = sbr.rel (%p1648) target = $region80
        $region79: #{tpu_custom_call.1} parent=55 // pred_region
          _
        $region80: #{tpu_custom_call.1} parent=55 // pred_fallthru
          _
        // Predicated region
        $region81: #{tpu_custom_call.1} parent=55 // pred_check
          %p1651 = pneg %p298
        $region82: #{tpu_custom_call.1} parent=55 // pred_check_branch
          %1653 = sbr.rel (%p1651) target = $region84
        $region83: #{tpu_custom_call.1} parent=55 // pred_region
          %s1655 = ssub.s32 256, 256
          %1656 = vsyncadd [#allocation10], %s1655
          %s1657 = smul.addr %s40, 2
          %s1658 = smul.addr %s1657, 128
          %s1659 = scalar_lea.hbm %s11, %s1658
          %s1660 = sshll.u32 [#allocation14], 4
          %s1661 = int_to_ptr.vmem [resolvable:$true] %s1660
          %1666 = dma.vmem_to_hbm [thread:$0]  %s1661, 256, %s1659, [#allocation10], 128, 128, 8
        $region84: #{tpu_custom_call.1} parent=55 // pred_fallthru
          _
        // Predicated region
        $region85: #{tpu_custom_call.1} parent=55 // pred_check
          %p1667 = pneg %p324
        $region86: #{tpu_custom_call.1} parent=55 // pred_check_branch
          %1669 = sbr.rel (%p1667) target = $region88
        $region87: #{tpu_custom_call.1} parent=55 // pred_region
          %s1671 = ssub.s32 256, 256
          %1672 = vsyncadd [#allocation16], %s1671
          %s1673 = smul.addr %s40, 2
          %s1674 = smul.addr %s1673, 128
          %s1675 = scalar_lea.hbm %s12, %s1674
          %s1676 = sshll.u32 [#allocation15], 4
          %s1677 = int_to_ptr.vmem [resolvable:$true] %s1676
          %1682 = dma.vmem_to_hbm [thread:$0]  %s1677, 256, %s1675, [#allocation16], 128, 128, 8
        $region88: #{tpu_custom_call.1} parent=55 // pred_fallthru
          _
        // Predicated region
        $region89: #{tpu_custom_call.1} parent=55 // pred_check
          %p1683 = pneg %p298
        $region90: #{tpu_custom_call.1} parent=55 // pred_check_branch
          %1685 = sbr.rel (%p1683) target = $region92
        $region91: #{tpu_custom_call.1} parent=55 // pred_region
          %1686 = dma.done [#allocation10], 256
        $region92: #{tpu_custom_call.1} parent=55 // pred_fallthru
          _
        // Predicated region
        $region93: #{tpu_custom_call.1} parent=55 // pred_check
          %p1687 = pneg %p324
        $region94: #{tpu_custom_call.1} parent=55 // pred_check_branch
          %1689 = sbr.rel (%p1687) target = $region96
        $region95: #{tpu_custom_call.1} parent=55 // pred_region
          %1690 = dma.done [#allocation16], 256
        $region96: #{tpu_custom_call.1} parent=55 // pred_fallthru
          _
      $region56: #{tpu_custom_call.1} parent=5 // pred_fallthru
        _
      %p1691 = scmp.le.s32.totalorder 2, %s31
      // Predicated region
      $region97: #{tpu_custom_call.1} parent=5 // pred_check
        %p1692 = pneg %p1691
      $region98: #{tpu_custom_call.1} parent=5 // pred_check_branch
        %1694 = sbr.rel (%p1692) target = $region100
      $region99: #{tpu_custom_call.1} parent=5 // pred_region
        %s1695 = ssub.s32 %s31, 2
        // Predicated region
        $region101: #{tpu_custom_call.1} parent=99 // pred_check
          %p1696 = pneg %p278
        $region102: #{tpu_custom_call.1} parent=99 // pred_check_branch
          %1698 = sbr.rel (%p1696) target = $region104
        $region103: #{tpu_custom_call.1} parent=99 // pred_region
          %p1699 = scmp.lt.s32.totalorder %s43, 2
          %s1700 = scalar_select %p1699, %s43, 2
          %p1701 = scmp.lt.s32.totalorder %s42, 0
          %s1702 = scalar_select %p1701, %s42, 0
          %s1703 = smul.addr %s1702, 2
          %s1704 = smul.addr %s1700, 2
          %s1705 = sadd.s32 %s1703, %s1704
          %s1706 = scalar_lea.vmem %s10, %s1705
        $region104: #{tpu_custom_call.1} parent=99 // pred_fallthru
          _
      $region100: #{tpu_custom_call.1} parent=5 // pred_fallthru
        _
    $region6: #{tpu_custom_call.1} parent=1 // loop_footer
      %s35 = sadd.s32 1, %s31
    $region7: #{tpu_custom_call.1} parent=1 // loop_footer_branch
      %30 = sbr.rel target = $region3
    $region8: #{tpu_custom_call.1} parent=1 // loop_exit
      _
    %1707 = vsyncpa [#allocation9], 1
    %s1708 = scalar_lea.sflag [#allocation9], 1
    %1709 = vsyncpa %s1708, 1
    %1710 = vsyncpa [#allocation12], 1
    %1711 = vsyncpa [#allocation10], 1
    %s1712 = scalar_lea.sflag [#allocation10], 1
    %1713 = vsyncpa %s1712, 1
    %1714 = vsyncpa [#allocation16], 1

</llo_original>
